<compile_context>
chip_gen: v5e
topology: v5e:2x2
jax: 0.10.0
libtpu: 0.0.40
codegen_flags: <defaults>
</compile_context>

<pallas_src>
import functools

import jax
import jax.numpy as jnp
from jax import lax
from jax.experimental import pallas as pl
from jax.experimental.pallas import tpu as pltpu


def _layernorm(x, gamma, beta, eps=1e-6):
    # PyTorch nn.LayerNorm semantics (biased variance over last dim), eps=1e-6 per spec.
    mean = jnp.mean(x, axis=-1, keepdims=True)
    var = jnp.mean(jnp.square(x - mean), axis=-1, keepdims=True)
    return (x - mean) * lax.rsqrt(var + eps) * gamma + beta


def _gelu_exact(x):
    # nn.GELU() default = exact erf GELU
    return 0.5 * x * (1.0 + lax.erf(x * 0.7071067811865475))


def block_kernel(x_ref, g1_ref, bt1_ref, wqkv_ref, bqkv_ref, wproj_ref, bproj_ref,
                 g2_ref, bt2_ref, w1_ref, b1_ref, w2_ref, b2_ref, o_ref,
                 out_scr, af_scr, *, n_heads, head_dim):
    xb = x_ref[...]                                   # (Nb, T, D) f32
    nb, t, d = xb.shape
    hd = head_dim
    x2 = xb.reshape(nb * t, d)                        # rows ordered (batch, token)

    # ---------------- attention branch ----------------
    ln1 = _layernorm(x2, g1_ref[...], bt1_ref[...])
    # attention scale is pre-folded into the q-third of wqkv/bqkv (wrapper-side)
    qkv = jnp.dot(ln1.astype(jnp.bfloat16), wqkv_ref[...],
                  preferred_element_type=jnp.float32) + bqkv_ref[...]     # (Nb*T, 3D) f32

    q3 = qkv[:, 0:d].reshape(nb, t, d)                # (Nb, T, D) f32 (scale already folded)
    k3 = qkv[:, d:2 * d].reshape(nb, t, d)
    v3 = qkv[:, 2 * d:3 * d].reshape(nb, t, d)

    # Per-head attention: lane-slice reads feed the MXU directly (no head-split scratch,
    # no staging stores). Single-batch-dim einsums only (robust Mosaic lowering).
    for h in range(n_heads):
        sl = slice(h * hd, (h + 1) * hd)
        q_h = q3[:, :, sl].astype(jnp.bfloat16)       # (Nb, T, hd)
        k_h = k3[:, :, sl].astype(jnp.bfloat16)
        v_h = v3[:, :, sl].astype(jnp.bfloat16)

        s_h = jnp.einsum('btd,bsd->bts', q_h, k_h,
                         preferred_element_type=jnp.float32)              # (Nb, T, T)
        m_h = jnp.max(s_h, axis=-1, keepdims=True)
        e_h = jnp.exp(s_h - m_h)
        p_h = e_h * pl.reciprocal(jnp.sum(e_h, axis=-1, keepdims=True))   # exact EUP recip
        out_h = jnp.einsum('bts,bsd->btd', p_h.astype(jnp.bfloat16), v_h,
                           preferred_element_type=jnp.float32)            # (Nb, T, hd)
        out_scr[:, h, :, :] = out_h.astype(jnp.bfloat16)

    # torch `.flatten(2)` with NO transpose: row (n, h) = head h output [tok0 | tok1 | ...].
    # Staged through a bf16 scratch (a lane-merging value reshape is not reliably lowered).
    outs = out_scr[...].reshape(nb * n_heads, t, hd)  # leading-dim merge only (layout-safe)
    for tt in range(t):
        af_scr[:, tt * hd:(tt + 1) * hd] = outs[:, tt, :]
    attn_flat = af_scr[...]                           # (Nb*H, T*hd) == (Nb*T, D) since T == H

    # TODO(synk): attn_drop / proj_drop / MLP dropout implemented as inference-mode identity
    # (PyTorch RNG-dependent dropout masks are not reproducible here).
    y = jnp.dot(attn_flat, wproj_ref[...],
                preferred_element_type=jnp.float32) + bproj_ref[...]      # (Nb*T, D)
    x1 = x2 + y

    # ---------------- MLP branch ----------------
    ln2 = _layernorm(x1, g2_ref[...], bt2_ref[...])
    h1 = _gelu_exact(jnp.dot(ln2.astype(jnp.bfloat16), w1_ref[...],
                             preferred_element_type=jnp.float32) + b1_ref[...])
    mlp_out = jnp.dot(h1.astype(jnp.bfloat16), w2_ref[...],
                      preferred_element_type=jnp.float32) + b2_ref[...]

    o_ref[...] = (x1 + mlp_out).reshape(nb, t, d)


def _pick_block_batch(N):
    # Aim for >= 4 grid steps: on v7x the "parallel" axis is split across 2 TensorCores,
    # so >= 2 steps per core keeps the x-block DMA / writeback double-buffered.
    for min_steps in (4, 2):
        upper = N // min_steps
        for nb in range(upper, 0, -1):
            if N % nb == 0:
                return nb
    return N


def vit_block(x, params, *, n_heads, block_batch=None):
    N, T, D = x.shape
    assert T == n_heads, "reference module only type-checks when n_tokens == n_heads"
    head_dim = D // n_heads

    nb = _pick_block_batch(N) if block_batch is None else block_batch
    assert N % nb == 0

    f32, bf16 = jnp.float32, jnp.bfloat16
    scale = head_dim ** -0.5

    # Fold the attention scale into the q-third of the qkv weight/bias (free constant
    # transform; deletes the in-kernel q * scale pass).
    wqkv = params["wqkv"].astype(f32).at[:, :D].multiply(scale)
    bqkv = params["bqkv"].astype(f32).at[:, :D].multiply(scale)

    # Zero-pad the MLP hidden dim up to a multiple of 128 (lane-dense h1 output).
    # Numerically exact: padded pre-activations are 0, GELU(0) = 0, padded w2 rows are 0.
    hidden = params["w1"].shape[1]
    hidden_p = ((hidden + 127) // 128) * 128
    w1 = jnp.zeros((D, hidden_p), f32).at[:, :hidden].set(params["w1"].astype(f32))
    bb1 = jnp.zeros((1, hidden_p), f32).at[:, :hidden].set(params["bb1"].astype(f32))
    w2 = jnp.zeros((hidden_p, D), f32).at[:hidden, :].set(params["w2"].astype(f32))

    weights = [
        params["g1"].astype(f32),     params["b1"].astype(f32),
        wqkv.astype(bf16),            bqkv,
        params["wproj"].astype(bf16), params["bproj"].astype(f32),
        params["g2"].astype(f32),     params["b2"].astype(f32),
        w1.astype(bf16),              bb1,
        w2.astype(bf16),              params["bb2"].astype(f32),
    ]

    def full_spec(a):
        zeros = (0,) * a.ndim
        return pl.BlockSpec(a.shape, lambda b, z=zeros: z)

    kernel = functools.partial(block_kernel, n_heads=n_heads, head_dim=head_dim)

    return pl.pallas_call(
        kernel,
        out_shape=jax.ShapeDtypeStruct((N, T, D), jnp.float32),
        grid=(N // nb,),
        in_specs=[pl.BlockSpec((nb, T, D), lambda b: (b, 0, 0))]
                 + [full_spec(w) for w in weights],
        out_specs=pl.BlockSpec((nb, T, D), lambda b: (b, 0, 0)),
        scratch_shapes=[
            pltpu.VMEM((nb, n_heads, T, head_dim), jnp.bfloat16),    # per-head attn outputs
            pltpu.VMEM((nb * n_heads, T * head_dim), jnp.bfloat16),  # flattened attn out
        ],
        compiler_params=pltpu.CompilerParams(
            dimension_semantics=("parallel",),
            # 48 MiB leaves headroom on v7x's 64 MiB physical VMEM while allowing
            # full-weight residency at real ViT sizes on v5e/v6e.
            vmem_limit_bytes=48 * 1024 * 1024,
        ),
    )(x, *weights)


# ---------------- pure-JAX reference (mirrors the PyTorch forward exactly) ----------------
def ref_block(x, p, n_heads):
    N, T, D = x.shape
    hd = D // n_heads

    def ln(z, g, b):
        m = z.mean(-1, keepdims=True)
        v = ((z - m) ** 2).mean(-1, keepdims=True)
        return (z - m) / jnp.sqrt(v + 1e-6) * g + b

    ln1 = ln(x, p["g1"], p["b1"])
    qkv = ln1 @ p["wqkv"] + p["bqkv"]
    qkv = qkv.reshape(N, T, 3, n_heads, hd).transpose(2, 0, 3, 1, 4)
    q, k, v = qkv[0], qkv[1], qkv[2]
    dot = jnp.einsum("bhtd,bhsd->bhts", q, k) * hd ** -0.5
    attn = jax.nn.softmax(dot, axis=-1)
    wavg = jnp.einsum("bhts,bhsd->bhtd", attn, v)
    wavg = wavg.reshape(N, n_heads, T * hd)          # torch .flatten(2) (no transpose!)
    y = wavg @ p["wproj"] + p["bproj"]
    x1 = x + y
    ln2 = ln(x1, p["g2"], p["b2"])
    h1 = jax.nn.gelu(ln2 @ p["w1"] + p["bb1"], approximate=False)
    return x1 + h1 @ p["w2"] + p["bb2"]


if __name__ == "__main__":
    N, H, D = 8, 4, 32
    T = H                                   # required by the reference module
    hidden = int(D * 0.4)                   # mlp_ratio = 0.4 -> 12

    master = jax.random.PRNGKey(0)
    kx, *ks = jax.random.split(master, 9)

    # Linear weights stored pre-transposed to (in, out); biases as (1, out).
    params = dict(
        g1=jnp.ones((1, D), jnp.float32),
        b1=jnp.zeros((1, D), jnp.float32),
        wqkv=0.05 * jax.random.normal(ks[0], (D, 3 * D), jnp.float32),
        bqkv=0.05 * jax.random.normal(ks[1], (1, 3 * D), jnp.float32),
        wproj=0.05 * jax.random.normal(ks[2], (D, D), jnp.float32),
        bproj=0.05 * jax.random.normal(ks[3], (1, D), jnp.float32),
        g2=jnp.ones((1, D), jnp.float32),
        b2=jnp.zeros((1, D), jnp.float32),
        w1=0.05 * jax.random.normal(ks[4], (D, hidden), jnp.float32),
        bb1=0.05 * jax.random.normal(ks[5], (1, hidden), jnp.float32),
        w2=0.05 * jax.random.normal(ks[6], (hidden, D), jnp.float32),
        bb2=0.05 * jax.random.normal(ks[7], (1, D), jnp.float32),
    )

    x = jax.random.normal(kx, (N, T, D), jnp.float32)

    out = jax.block_until_ready(vit_block(x, params, n_heads=H))
    ref = jax.block_until_ready(ref_block(x, params, H))

    assert out.shape == (N, T, D)
    max_err = float(jnp.abs(out - ref).max())
    # bf16 MXU operands vs f32 reference -> loosened tolerance.
    assert jnp.allclose(out, ref, atol=2e-2, rtol=2e-2), max_err
    print("KERNEL_OK")
</pallas_src>

<mosaic_0001>
module attributes {stable_mosaic.version = 11 : i64} {
  func.func @block_kernel(%arg0: i32, %arg1: memref<2x4x32xf32, #tpu.memory_space<vmem>>, %arg2: memref<1x32xf32, #tpu.memory_space<vmem>>, %arg3: memref<1x32xf32, #tpu.memory_space<vmem>>, %arg4: memref<32x96xbf16, #tpu.memory_space<vmem>>, %arg5: memref<1x96xf32, #tpu.memory_space<vmem>>, %arg6: memref<32x32xbf16, #tpu.memory_space<vmem>>, %arg7: memref<1x32xf32, #tpu.memory_space<vmem>>, %arg8: memref<1x32xf32, #tpu.memory_space<vmem>>, %arg9: memref<1x32xf32, #tpu.memory_space<vmem>>, %arg10: memref<32x128xbf16, #tpu.memory_space<vmem>>, %arg11: memref<1x128xf32, #tpu.memory_space<vmem>>, %arg12: memref<128x32xbf16, #tpu.memory_space<vmem>>, %arg13: memref<1x32xf32, #tpu.memory_space<vmem>>, %arg14: memref<2x4x32xf32, #tpu.memory_space<vmem>>, %arg15: memref<2x4x4x8xbf16, #tpu.memory_space<vmem>>, %arg16: memref<8x32xbf16, #tpu.memory_space<vmem>>) attributes {dimension_semantics = [#tpu.dimension_semantics<parallel>], iteration_bounds = array<i64: 4>, scalar_prefetch = 0 : i64, scratch_operands = 2 : i64, tpu.core_type = #tpu.core_type<tc>, window_params = [{transform_indices = @transform_0, window_bounds = array<i64: 2, 4, 32>}, {pipeline_mode = #tpu.pipeline_mode<synchronous>, transform_indices = @transform_1, window_bounds = array<i64: 1, 32>}, {pipeline_mode = #tpu.pipeline_mode<synchronous>, transform_indices = @transform_2, window_bounds = array<i64: 1, 32>}, {pipeline_mode = #tpu.pipeline_mode<synchronous>, transform_indices = @transform_3, window_bounds = array<i64: 32, 96>}, {pipeline_mode = #tpu.pipeline_mode<synchronous>, transform_indices = @transform_4, window_bounds = array<i64: 1, 96>}, {pipeline_mode = #tpu.pipeline_mode<synchronous>, transform_indices = @transform_5, window_bounds = array<i64: 32, 32>}, {pipeline_mode = #tpu.pipeline_mode<synchronous>, transform_indices = @transform_6, window_bounds = array<i64: 1, 32>}, {pipeline_mode = #tpu.pipeline_mode<synchronous>, transform_indices = @transform_7, window_bounds = array<i64: 1, 32>}, {pipeline_mode = #tpu.pipeline_mode<synchronous>, transform_indices = @transform_8, window_bounds = array<i64: 1, 32>}, {pipeline_mode = #tpu.pipeline_mode<synchronous>, transform_indices = @transform_9, window_bounds = array<i64: 32, 128>}, {pipeline_mode = #tpu.pipeline_mode<synchronous>, transform_indices = @transform_10, window_bounds = array<i64: 1, 128>}, {pipeline_mode = #tpu.pipeline_mode<synchronous>, transform_indices = @transform_11, window_bounds = array<i64: 128, 32>}, {pipeline_mode = #tpu.pipeline_mode<synchronous>, transform_indices = @transform_12, window_bounds = array<i64: 1, 32>}, {transform_indices = @transform_13, window_bounds = array<i64: 2, 4, 32>}]} {
    %c0 = arith.constant 0 : index
    %c0_0 = arith.constant 0 : index
    %c0_1 = arith.constant 0 : index
    %0 = vector.load %arg1[%c0, %c0_0, %c0_1] : memref<2x4x32xf32, #tpu.memory_space<vmem>>, vector<2x4x32xf32>
    %1 = vector.shape_cast %0 : vector<2x4x32xf32> to vector<8x32xf32>
    %c0_2 = arith.constant 0 : index
    %c0_3 = arith.constant 0 : index
    %2 = vector.load %arg2[%c0_2, %c0_3] : memref<1x32xf32, #tpu.memory_space<vmem>>, vector<1x32xf32>
    %c0_4 = arith.constant 0 : index
    %c0_5 = arith.constant 0 : index
    %3 = vector.load %arg3[%c0_4, %c0_5] : memref<1x32xf32, #tpu.memory_space<vmem>>, vector<1x32xf32>
    %cst = arith.constant dense<0.000000e+00> : vector<8xf32>
    %4 = vector.multi_reduction <add>, %1, %cst [1] : vector<8x32xf32> to vector<8xf32>
    %5 = vector.shape_cast %4 : vector<8xf32> to vector<8x1xf32>
    %cst_6 = arith.constant 3.200000e+01 : f32
    %6 = vector.broadcast %cst_6 : f32 to vector<8x1xf32>
    %7 = arith.divf %5, %6 : vector<8x1xf32>
    %8 = vector.broadcast %7 : vector<8x1xf32> to vector<8x32xf32>
    %9 = arith.subf %1, %8 : vector<8x32xf32>
    %10 = arith.mulf %9, %9 : vector<8x32xf32>
    %cst_7 = arith.constant dense<0.000000e+00> : vector<8xf32>
    %11 = vector.multi_reduction <add>, %10, %cst_7 [1] : vector<8x32xf32> to vector<8xf32>
    %12 = vector.shape_cast %11 : vector<8xf32> to vector<8x1xf32>
    %cst_8 = arith.constant 3.200000e+01 : f32
    %13 = vector.broadcast %cst_8 : f32 to vector<8x1xf32>
    %14 = arith.divf %12, %13 : vector<8x1xf32>
    %15 = vector.broadcast %7 : vector<8x1xf32> to vector<8x32xf32>
    %16 = arith.subf %1, %15 : vector<8x32xf32>
    %cst_9 = arith.constant 9.99999997E-7 : f32
    %17 = vector.broadcast %cst_9 : f32 to vector<8x1xf32>
    %18 = arith.addf %14, %17 : vector<8x1xf32>
    %19 = math.rsqrt %18 : vector<8x1xf32>
    %20 = vector.broadcast %19 : vector<8x1xf32> to vector<8x32xf32>
    %21 = arith.mulf %16, %20 : vector<8x32xf32>
    %22 = vector.broadcast %2 : vector<1x32xf32> to vector<8x32xf32>
    %23 = arith.mulf %21, %22 : vector<8x32xf32>
    %24 = vector.broadcast %3 : vector<1x32xf32> to vector<8x32xf32>
    %25 = arith.addf %23, %24 : vector<8x32xf32>
    %26 = arith.truncf %25 : vector<8x32xf32> to vector<8x32xbf16>
    %c0_10 = arith.constant 0 : index
    %c0_11 = arith.constant 0 : index
    %27 = vector.load %arg4[%c0_10, %c0_11] : memref<32x96xbf16, #tpu.memory_space<vmem>>, vector<32x96xbf16>
    %cst_12 = arith.constant dense<0.000000e+00> : vector<8x96xf32>
    %28 = tpu.matmul %26, %27, %cst_12 {dimension_numbers = #tpu.dot_dimension_numbers<[1], [0], [0], [1], [0, 0, 1, 1], [], []>} : vector<8x32xbf16>, vector<32x96xbf16>, vector<8x96xf32> -> vector<8x96xf32>
    %c0_13 = arith.constant 0 : index
    %c0_14 = arith.constant 0 : index
    %29 = vector.load %arg5[%c0_13, %c0_14] : memref<1x96xf32, #tpu.memory_space<vmem>>, vector<1x96xf32>
    %30 = vector.broadcast %29 : vector<1x96xf32> to vector<8x96xf32>
    %31 = arith.addf %28, %30 : vector<8x96xf32>
    %32 = vector.extract_strided_slice %31 {offsets = [0, 0], sizes = [8, 32], strides = [1, 1]} : vector<8x96xf32> to vector<8x32xf32>
    %33 = vector.shape_cast %32 : vector<8x32xf32> to vector<2x4x32xf32>
    %34 = vector.extract_strided_slice %31 {offsets = [0, 32], sizes = [8, 32], strides = [1, 1]} : vector<8x96xf32> to vector<8x32xf32>
    %35 = vector.shape_cast %34 : vector<8x32xf32> to vector<2x4x32xf32>
    %36 = vector.extract_strided_slice %31 {offsets = [0, 64], sizes = [8, 32], strides = [1, 1]} : vector<8x96xf32> to vector<8x32xf32>
    %37 = vector.shape_cast %36 : vector<8x32xf32> to vector<2x4x32xf32>
    %38 = vector.extract_strided_slice %33 {offsets = [0, 0, 0], sizes = [2, 4, 8], strides = [1, 1, 1]} : vector<2x4x32xf32> to vector<2x4x8xf32>
    %39 = arith.truncf %38 : vector<2x4x8xf32> to vector<2x4x8xbf16>
    %40 = vector.extract_strided_slice %35 {offsets = [0, 0, 0], sizes = [2, 4, 8], strides = [1, 1, 1]} : vector<2x4x32xf32> to vector<2x4x8xf32>
    %41 = arith.truncf %40 : vector<2x4x8xf32> to vector<2x4x8xbf16>
    %42 = vector.extract_strided_slice %37 {offsets = [0, 0, 0], sizes = [2, 4, 8], strides = [1, 1, 1]} : vector<2x4x32xf32> to vector<2x4x8xf32>
    %43 = arith.truncf %42 : vector<2x4x8xf32> to vector<2x4x8xbf16>
    "tpu.trace_start"() <{level = 10 : i32, message = "btd,bsd->bts"}> : () -> ()
    %cst_15 = arith.constant dense<0.000000e+00> : vector<2x4x4xf32>
    %44 = tpu.matmul %39, %41, %cst_15 {dimension_numbers = #tpu.dot_dimension_numbers<[2], [2], [1], [1], [0, 0, 0, 1, 1, 1], [0], [0]>} : vector<2x4x8xbf16>, vector<2x4x8xbf16>, vector<2x4x4xf32> -> vector<2x4x4xf32>
    "tpu.trace_stop"() : () -> ()
    %cst_16 = arith.constant dense<0xFF800000> : vector<2x4xf32>
    %45 = vector.multi_reduction <maximumf>, %44, %cst_16 [2] : vector<2x4x4xf32> to vector<2x4xf32>
    %46 = vector.shape_cast %45 : vector<2x4xf32> to vector<2x4x1xf32>
    %47 = vector.broadcast %46 : vector<2x4x1xf32> to vector<2x4x4xf32>
    %48 = arith.subf %44, %47 : vector<2x4x4xf32>
    %49 = math.exp %48 : vector<2x4x4xf32>
    %cst_17 = arith.constant dense<0.000000e+00> : vector<2x4xf32>
    %50 = vector.multi_reduction <add>, %49, %cst_17 [2] : vector<2x4x4xf32> to vector<2x4xf32>
    %51 = vector.shape_cast %50 : vector<2x4xf32> to vector<2x4x1xf32>
    %52 = tpu.reciprocal %51 : vector<2x4x1xf32> -> vector<2x4x1xf32>
    %53 = vector.broadcast %52 : vector<2x4x1xf32> to vector<2x4x4xf32>
    %54 = arith.mulf %49, %53 : vector<2x4x4xf32>
    %55 = arith.truncf %54 : vector<2x4x4xf32> to vector<2x4x4xbf16>
    "tpu.trace_start"() <{level = 10 : i32, message = "bts,bsd->btd"}> : () -> ()
    %cst_18 = arith.constant dense<0.000000e+00> : vector<2x4x8xf32>
    %56 = tpu.matmul %55, %43, %cst_18 {dimension_numbers = #tpu.dot_dimension_numbers<[2], [1], [1], [2], [0, 0, 0, 1, 1, 2], [0], [0]>} : vector<2x4x4xbf16>, vector<2x4x8xbf16>, vector<2x4x8xf32> -> vector<2x4x8xf32>
    "tpu.trace_stop"() : () -> ()
    %57 = arith.truncf %56 : vector<2x4x8xf32> to vector<2x4x8xbf16>
    %c0_19 = arith.constant 0 : index
    %c0_20 = arith.constant 0 : index
    %c0_21 = arith.constant 0 : index
    %c0_22 = arith.constant 0 : index
    %58 = vector.load %arg15[%c0_19, %c0_20, %c0_21, %c0_22] : memref<2x4x4x8xbf16, #tpu.memory_space<vmem>>, vector<2x1x4x8xbf16>
    %59 = vector.shape_cast %58 : vector<2x1x4x8xbf16> to vector<2x4x8xbf16>
    %60 = vector.shape_cast %57 : vector<2x4x8xbf16> to vector<2x1x4x8xbf16>
    tpu.vector_store %arg15[%c0_19, %c0_20, %c0_21, %c0_22], %60 {strides = array<i32>} : memref<2x4x4x8xbf16, #tpu.memory_space<vmem>>, vector<2x1x4x8xbf16>,
    %61 = vector.extract_strided_slice %33 {offsets = [0, 0, 8], sizes = [2, 4, 8], strides = [1, 1, 1]} : vector<2x4x32xf32> to vector<2x4x8xf32>
    %62 = arith.truncf %61 : vector<2x4x8xf32> to vector<2x4x8xbf16>
    %63 = vector.extract_strided_slice %35 {offsets = [0, 0, 8], sizes = [2, 4, 8], strides = [1, 1, 1]} : vector<2x4x32xf32> to vector<2x4x8xf32>
    %64 = arith.truncf %63 : vector<2x4x8xf32> to vector<2x4x8xbf16>
    %65 = vector.extract_strided_slice %37 {offsets = [0, 0, 8], sizes = [2, 4, 8], strides = [1, 1, 1]} : vector<2x4x32xf32> to vector<2x4x8xf32>
    %66 = arith.truncf %65 : vector<2x4x8xf32> to vector<2x4x8xbf16>
    "tpu.trace_start"() <{level = 10 : i32, message = "btd,bsd->bts"}> : () -> ()
    %cst_23 = arith.constant dense<0.000000e+00> : vector<2x4x4xf32>
    %67 = tpu.matmul %62, %64, %cst_23 {dimension_numbers = #tpu.dot_dimension_numbers<[2], [2], [1], [1], [0, 0, 0, 1, 1, 1], [0], [0]>} : vector<2x4x8xbf16>, vector<2x4x8xbf16>, vector<2x4x4xf32> -> vector<2x4x4xf32>
    "tpu.trace_stop"() : () -> ()
    %cst_24 = arith.constant dense<0xFF800000> : vector<2x4xf32>
    %68 = vector.multi_reduction <maximumf>, %67, %cst_24 [2] : vector<2x4x4xf32> to vector<2x4xf32>
    %69 = vector.shape_cast %68 : vector<2x4xf32> to vector<2x4x1xf32>
    %70 = vector.broadcast %69 : vector<2x4x1xf32> to vector<2x4x4xf32>
    %71 = arith.subf %67, %70 : vector<2x4x4xf32>
    %72 = math.exp %71 : vector<2x4x4xf32>
    %cst_25 = arith.constant dense<0.000000e+00> : vector<2x4xf32>
    %73 = vector.multi_reduction <add>, %72, %cst_25 [2] : vector<2x4x4xf32> to vector<2x4xf32>
    %74 = vector.shape_cast %73 : vector<2x4xf32> to vector<2x4x1xf32>
    %75 = tpu.reciprocal %74 : vector<2x4x1xf32> -> vector<2x4x1xf32>
    %76 = vector.broadcast %75 : vector<2x4x1xf32> to vector<2x4x4xf32>
    %77 = arith.mulf %72, %76 : vector<2x4x4xf32>
    %78 = arith.truncf %77 : vector<2x4x4xf32> to vector<2x4x4xbf16>
    "tpu.trace_start"() <{level = 10 : i32, message = "bts,bsd->btd"}> : () -> ()
    %cst_26 = arith.constant dense<0.000000e+00> : vector<2x4x8xf32>
    %79 = tpu.matmul %78, %66, %cst_26 {dimension_numbers = #tpu.dot_dimension_numbers<[2], [1], [1], [2], [0, 0, 0, 1, 1, 2], [0], [0]>} : vector<2x4x4xbf16>, vector<2x4x8xbf16>, vector<2x4x8xf32> -> vector<2x4x8xf32>
    "tpu.trace_stop"() : () -> ()
    %80 = arith.truncf %79 : vector<2x4x8xf32> to vector<2x4x8xbf16>
    %c0_27 = arith.constant 0 : index
    %c1 = arith.constant 1 : index
    %c0_28 = arith.constant 0 : index
    %c0_29 = arith.constant 0 : index
    %81 = vector.load %arg15[%c0_27, %c1, %c0_28, %c0_29] : memref<2x4x4x8xbf16, #tpu.memory_space<vmem>>, vector<2x1x4x8xbf16>
    %82 = vector.shape_cast %81 : vector<2x1x4x8xbf16> to vector<2x4x8xbf16>
    %83 = vector.shape_cast %80 : vector<2x4x8xbf16> to vector<2x1x4x8xbf16>
    tpu.vector_store %arg15[%c0_27, %c1, %c0_28, %c0_29], %83 {strides = array<i32>} : memref<2x4x4x8xbf16, #tpu.memory_space<vmem>>, vector<2x1x4x8xbf16>,
    %84 = vector.extract_strided_slice %33 {offsets = [0, 0, 16], sizes = [2, 4, 8], strides = [1, 1, 1]} : vector<2x4x32xf32> to vector<2x4x8xf32>
    %85 = arith.truncf %84 : vector<2x4x8xf32> to vector<2x4x8xbf16>
    %86 = vector.extract_strided_slice %35 {offsets = [0, 0, 16], sizes = [2, 4, 8], strides = [1, 1, 1]} : vector<2x4x32xf32> to vector<2x4x8xf32>
    %87 = arith.truncf %86 : vector<2x4x8xf32> to vector<2x4x8xbf16>
    %88 = vector.extract_strided_slice %37 {offsets = [0, 0, 16], sizes = [2, 4, 8], strides = [1, 1, 1]} : vector<2x4x32xf32> to vector<2x4x8xf32>
    %89 = arith.truncf %88 : vector<2x4x8xf32> to vector<2x4x8xbf16>
    "tpu.trace_start"() <{level = 10 : i32, message = "btd,bsd->bts"}> : () -> ()
    %cst_30 = arith.constant dense<0.000000e+00> : vector<2x4x4xf32>
    %90 = tpu.matmul %85, %87, %cst_30 {dimension_numbers = #tpu.dot_dimension_numbers<[2], [2], [1], [1], [0, 0, 0, 1, 1, 1], [0], [0]>} : vector<2x4x8xbf16>, vector<2x4x8xbf16>, vector<2x4x4xf32> -> vector<2x4x4xf32>
    "tpu.trace_stop"() : () -> ()
    %cst_31 = arith.constant dense<0xFF800000> : vector<2x4xf32>
    %91 = vector.multi_reduction <maximumf>, %90, %cst_31 [2] : vector<2x4x4xf32> to vector<2x4xf32>
    %92 = vector.shape_cast %91 : vector<2x4xf32> to vector<2x4x1xf32>
    %93 = vector.broadcast %92 : vector<2x4x1xf32> to vector<2x4x4xf32>
    %94 = arith.subf %90, %93 : vector<2x4x4xf32>
    %95 = math.exp %94 : vector<2x4x4xf32>
    %cst_32 = arith.constant dense<0.000000e+00> : vector<2x4xf32>
    %96 = vector.multi_reduction <add>, %95, %cst_32 [2] : vector<2x4x4xf32> to vector<2x4xf32>
    %97 = vector.shape_cast %96 : vector<2x4xf32> to vector<2x4x1xf32>
    %98 = tpu.reciprocal %97 : vector<2x4x1xf32> -> vector<2x4x1xf32>
    %99 = vector.broadcast %98 : vector<2x4x1xf32> to vector<2x4x4xf32>
    %100 = arith.mulf %95, %99 : vector<2x4x4xf32>
    %101 = arith.truncf %100 : vector<2x4x4xf32> to vector<2x4x4xbf16>
    "tpu.trace_start"() <{level = 10 : i32, message = "bts,bsd->btd"}> : () -> ()
    %cst_33 = arith.constant dense<0.000000e+00> : vector<2x4x8xf32>
    %102 = tpu.matmul %101, %89, %cst_33 {dimension_numbers = #tpu.dot_dimension_numbers<[2], [1], [1], [2], [0, 0, 0, 1, 1, 2], [0], [0]>} : vector<2x4x4xbf16>, vector<2x4x8xbf16>, vector<2x4x8xf32> -> vector<2x4x8xf32>
    "tpu.trace_stop"() : () -> ()
    %103 = arith.truncf %102 : vector<2x4x8xf32> to vector<2x4x8xbf16>
    %c0_34 = arith.constant 0 : index
    %c2 = arith.constant 2 : index
    %c0_35 = arith.constant 0 : index
    %c0_36 = arith.constant 0 : index
    %104 = vector.load %arg15[%c0_34, %c2, %c0_35, %c0_36] : memref<2x4x4x8xbf16, #tpu.memory_space<vmem>>, vector<2x1x4x8xbf16>
    %105 = vector.shape_cast %104 : vector<2x1x4x8xbf16> to vector<2x4x8xbf16>
    %106 = vector.shape_cast %103 : vector<2x4x8xbf16> to vector<2x1x4x8xbf16>
    tpu.vector_store %arg15[%c0_34, %c2, %c0_35, %c0_36], %106 {strides = array<i32>} : memref<2x4x4x8xbf16, #tpu.memory_space<vmem>>, vector<2x1x4x8xbf16>,
    %107 = vector.extract_strided_slice %33 {offsets = [0, 0, 24], sizes = [2, 4, 8], strides = [1, 1, 1]} : vector<2x4x32xf32> to vector<2x4x8xf32>
    %108 = arith.truncf %107 : vector<2x4x8xf32> to vector<2x4x8xbf16>
    %109 = vector.extract_strided_slice %35 {offsets = [0, 0, 24], sizes = [2, 4, 8], strides = [1, 1, 1]} : vector<2x4x32xf32> to vector<2x4x8xf32>
    %110 = arith.truncf %109 : vector<2x4x8xf32> to vector<2x4x8xbf16>
    %111 = vector.extract_strided_slice %37 {offsets = [0, 0, 24], sizes = [2, 4, 8], strides = [1, 1, 1]} : vector<2x4x32xf32> to vector<2x4x8xf32>
    %112 = arith.truncf %111 : vector<2x4x8xf32> to vector<2x4x8xbf16>
    "tpu.trace_start"() <{level = 10 : i32, message = "btd,bsd->bts"}> : () -> ()
    %cst_37 = arith.constant dense<0.000000e+00> : vector<2x4x4xf32>
    %113 = tpu.matmul %108, %110, %cst_37 {dimension_numbers = #tpu.dot_dimension_numbers<[2], [2], [1], [1], [0, 0, 0, 1, 1, 1], [0], [0]>} : vector<2x4x8xbf16>, vector<2x4x8xbf16>, vector<2x4x4xf32> -> vector<2x4x4xf32>
    "tpu.trace_stop"() : () -> ()
    %cst_38 = arith.constant dense<0xFF800000> : vector<2x4xf32>
    %114 = vector.multi_reduction <maximumf>, %113, %cst_38 [2] : vector<2x4x4xf32> to vector<2x4xf32>
    %115 = vector.shape_cast %114 : vector<2x4xf32> to vector<2x4x1xf32>
    %116 = vector.broadcast %115 : vector<2x4x1xf32> to vector<2x4x4xf32>
    %117 = arith.subf %113, %116 : vector<2x4x4xf32>
    %118 = math.exp %117 : vector<2x4x4xf32>
    %cst_39 = arith.constant dense<0.000000e+00> : vector<2x4xf32>
    %119 = vector.multi_reduction <add>, %118, %cst_39 [2] : vector<2x4x4xf32> to vector<2x4xf32>
    %120 = vector.shape_cast %119 : vector<2x4xf32> to vector<2x4x1xf32>
    %121 = tpu.reciprocal %120 : vector<2x4x1xf32> -> vector<2x4x1xf32>
    %122 = vector.broadcast %121 : vector<2x4x1xf32> to vector<2x4x4xf32>
    %123 = arith.mulf %118, %122 : vector<2x4x4xf32>
    %124 = arith.truncf %123 : vector<2x4x4xf32> to vector<2x4x4xbf16>
    "tpu.trace_start"() <{level = 10 : i32, message = "bts,bsd->btd"}> : () -> ()
    %cst_40 = arith.constant dense<0.000000e+00> : vector<2x4x8xf32>
    %125 = tpu.matmul %124, %112, %cst_40 {dimension_numbers = #tpu.dot_dimension_numbers<[2], [1], [1], [2], [0, 0, 0, 1, 1, 2], [0], [0]>} : vector<2x4x4xbf16>, vector<2x4x8xbf16>, vector<2x4x8xf32> -> vector<2x4x8xf32>
    "tpu.trace_stop"() : () -> ()
    %126 = arith.truncf %125 : vector<2x4x8xf32> to vector<2x4x8xbf16>
    %c0_41 = arith.constant 0 : index
    %c3 = arith.constant 3 : index
    %c0_42 = arith.constant 0 : index
    %c0_43 = arith.constant 0 : index
    %127 = vector.load %arg15[%c0_41, %c3, %c0_42, %c0_43] : memref<2x4x4x8xbf16, #tpu.memory_space<vmem>>, vector<2x1x4x8xbf16>
    %128 = vector.shape_cast %127 : vector<2x1x4x8xbf16> to vector<2x4x8xbf16>
    %129 = vector.shape_cast %126 : vector<2x4x8xbf16> to vector<2x1x4x8xbf16>
    tpu.vector_store %arg15[%c0_41, %c3, %c0_42, %c0_43], %129 {strides = array<i32>} : memref<2x4x4x8xbf16, #tpu.memory_space<vmem>>, vector<2x1x4x8xbf16>,
    %c0_44 = arith.constant 0 : index
    %c0_45 = arith.constant 0 : index
    %c0_46 = arith.constant 0 : index
    %c0_47 = arith.constant 0 : index
    %130 = vector.load %arg15[%c0_44, %c0_45, %c0_46, %c0_47] : memref<2x4x4x8xbf16, #tpu.memory_space<vmem>>, vector<2x4x4x8xbf16>
    %131 = vector.shape_cast %130 : vector<2x4x4x8xbf16> to vector<8x4x8xbf16>
    %132 = vector.extract_strided_slice %131 {offsets = [0, 0, 0], sizes = [8, 1, 8], strides = [1, 1, 1]} : vector<8x4x8xbf16> to vector<8x1x8xbf16>
    %133 = vector.shape_cast %132 : vector<8x1x8xbf16> to vector<8x8xbf16>
    %c0_48 = arith.constant 0 : index
    %c0_49 = arith.constant 0 : index
    %134 = vector.load %arg16[%c0_48, %c0_49] : memref<8x32xbf16, #tpu.memory_space<vmem>>, vector<8x8xbf16>
    tpu.vector_store %arg16[%c0_48, %c0_49], %133 {strides = array<i32>} : memref<8x32xbf16, #tpu.memory_space<vmem>>, vector<8x8xbf16>,
    %135 = vector.extract_strided_slice %131 {offsets = [0, 1, 0], sizes = [8, 1, 8], strides = [1, 1, 1]} : vector<8x4x8xbf16> to vector<8x1x8xbf16>
    %136 = vector.shape_cast %135 : vector<8x1x8xbf16> to vector<8x8xbf16>
    %c0_50 = arith.constant 0 : index
    %c8 = arith.constant 8 : index
    %137 = vector.load %arg16[%c0_50, %c8] : memref<8x32xbf16, #tpu.memory_space<vmem>>, vector<8x8xbf16>
    tpu.vector_store %arg16[%c0_50, %c8], %136 {strides = array<i32>} : memref<8x32xbf16, #tpu.memory_space<vmem>>, vector<8x8xbf16>,
    %138 = vector.extract_strided_slice %131 {offsets = [0, 2, 0], sizes = [8, 1, 8], strides = [1, 1, 1]} : vector<8x4x8xbf16> to vector<8x1x8xbf16>
    %139 = vector.shape_cast %138 : vector<8x1x8xbf16> to vector<8x8xbf16>
    %c0_51 = arith.constant 0 : index
    %c16 = arith.constant 16 : index
    %140 = vector.load %arg16[%c0_51, %c16] : memref<8x32xbf16, #tpu.memory_space<vmem>>, vector<8x8xbf16>
    tpu.vector_store %arg16[%c0_51, %c16], %139 {strides = array<i32>} : memref<8x32xbf16, #tpu.memory_space<vmem>>, vector<8x8xbf16>,
    %141 = vector.extract_strided_slice %131 {offsets = [0, 3, 0], sizes = [8, 1, 8], strides = [1, 1, 1]} : vector<8x4x8xbf16> to vector<8x1x8xbf16>
    %142 = vector.shape_cast %141 : vector<8x1x8xbf16> to vector<8x8xbf16>
    %c0_52 = arith.constant 0 : index
    %c24 = arith.constant 24 : index
    %143 = vector.load %arg16[%c0_52, %c24] : memref<8x32xbf16, #tpu.memory_space<vmem>>, vector<8x8xbf16>
    tpu.vector_store %arg16[%c0_52, %c24], %142 {strides = array<i32>} : memref<8x32xbf16, #tpu.memory_space<vmem>>, vector<8x8xbf16>,
    %c0_53 = arith.constant 0 : index
    %c0_54 = arith.constant 0 : index
    %144 = vector.load %arg16[%c0_53, %c0_54] : memref<8x32xbf16, #tpu.memory_space<vmem>>, vector<8x32xbf16>
    %c0_55 = arith.constant 0 : index
    %c0_56 = arith.constant 0 : index
    %145 = vector.load %arg6[%c0_55, %c0_56] : memref<32x32xbf16, #tpu.memory_space<vmem>>, vector<32x32xbf16>
    %cst_57 = arith.constant dense<0.000000e+00> : vector<8x32xf32>
    %146 = tpu.matmul %144, %145, %cst_57 {dimension_numbers = #tpu.dot_dimension_numbers<[1], [0], [0], [1], [0, 0, 1, 1], [], []>} : vector<8x32xbf16>, vector<32x32xbf16>, vector<8x32xf32> -> vector<8x32xf32>
    %c0_58 = arith.constant 0 : index
    %c0_59 = arith.constant 0 : index
    %147 = vector.load %arg7[%c0_58, %c0_59] : memref<1x32xf32, #tpu.memory_space<vmem>>, vector<1x32xf32>
    %148 = vector.broadcast %147 : vector<1x32xf32> to vector<8x32xf32>
    %149 = arith.addf %146, %148 : vector<8x32xf32>
    %150 = arith.addf %1, %149 : vector<8x32xf32>
    %c0_60 = arith.constant 0 : index
    %c0_61 = arith.constant 0 : index
    %151 = vector.load %arg8[%c0_60, %c0_61] : memref<1x32xf32, #tpu.memory_space<vmem>>, vector<1x32xf32>
    %c0_62 = arith.constant 0 : index
    %c0_63 = arith.constant 0 : index
    %152 = vector.load %arg9[%c0_62, %c0_63] : memref<1x32xf32, #tpu.memory_space<vmem>>, vector<1x32xf32>
    %cst_64 = arith.constant dense<0.000000e+00> : vector<8xf32>
    %153 = vector.multi_reduction <add>, %150, %cst_64 [1] : vector<8x32xf32> to vector<8xf32>
    %154 = vector.shape_cast %153 : vector<8xf32> to vector<8x1xf32>
    %cst_65 = arith.constant 3.200000e+01 : f32
    %155 = vector.broadcast %cst_65 : f32 to vector<8x1xf32>
    %156 = arith.divf %154, %155 : vector<8x1xf32>
    %157 = vector.broadcast %156 : vector<8x1xf32> to vector<8x32xf32>
    %158 = arith.subf %150, %157 : vector<8x32xf32>
    %159 = arith.mulf %158, %158 : vector<8x32xf32>
    %cst_66 = arith.constant dense<0.000000e+00> : vector<8xf32>
    %160 = vector.multi_reduction <add>, %159, %cst_66 [1] : vector<8x32xf32> to vector<8xf32>
    %161 = vector.shape_cast %160 : vector<8xf32> to vector<8x1xf32>
    %cst_67 = arith.constant 3.200000e+01 : f32
    %162 = vector.broadcast %cst_67 : f32 to vector<8x1xf32>
    %163 = arith.divf %161, %162 : vector<8x1xf32>
    %164 = vector.broadcast %156 : vector<8x1xf32> to vector<8x32xf32>
    %165 = arith.subf %150, %164 : vector<8x32xf32>
    %cst_68 = arith.constant 9.99999997E-7 : f32
    %166 = vector.broadcast %cst_68 : f32 to vector<8x1xf32>
    %167 = arith.addf %163, %166 : vector<8x1xf32>
    %168 = math.rsqrt %167 : vector<8x1xf32>
    %169 = vector.broadcast %168 : vector<8x1xf32> to vector<8x32xf32>
    %170 = arith.mulf %165, %169 : vector<8x32xf32>
    %171 = vector.broadcast %151 : vector<1x32xf32> to vector<8x32xf32>
    %172 = arith.mulf %170, %171 : vector<8x32xf32>
    %173 = vector.broadcast %152 : vector<1x32xf32> to vector<8x32xf32>
    %174 = arith.addf %172, %173 : vector<8x32xf32>
    %175 = arith.truncf %174 : vector<8x32xf32> to vector<8x32xbf16>
    %c0_69 = arith.constant 0 : index
    %c0_70 = arith.constant 0 : index
    %176 = vector.load %arg10[%c0_69, %c0_70] : memref<32x128xbf16, #tpu.memory_space<vmem>>, vector<32x128xbf16>
    %cst_71 = arith.constant dense<0.000000e+00> : vector<8x128xf32>
    %177 = tpu.matmul %175, %176, %cst_71 {dimension_numbers = #tpu.dot_dimension_numbers<[1], [0], [0], [1], [0, 0, 1, 1], [], []>} : vector<8x32xbf16>, vector<32x128xbf16>, vector<8x128xf32> -> vector<8x128xf32>
    %c0_72 = arith.constant 0 : index
    %c0_73 = arith.constant 0 : index
    %178 = vector.load %arg11[%c0_72, %c0_73] : memref<1x128xf32, #tpu.memory_space<vmem>>, vector<1x128xf32>
    %179 = vector.broadcast %178 : vector<1x128xf32> to vector<8x128xf32>
    %180 = arith.addf %177, %179 : vector<8x128xf32>
    %cst_74 = arith.constant 5.000000e-01 : f32
    %181 = vector.broadcast %cst_74 : f32 to vector<8x128xf32>
    %182 = arith.mulf %181, %180 : vector<8x128xf32>
    %cst_75 = arith.constant 0.707106769 : f32
    %183 = vector.broadcast %cst_75 : f32 to vector<8x128xf32>
    %184 = arith.mulf %180, %183 : vector<8x128xf32>
    %185 = math.erf %184 : vector<8x128xf32>
    %cst_76 = arith.constant 1.000000e+00 : f32
    %186 = vector.broadcast %cst_76 : f32 to vector<8x128xf32>
    %187 = arith.addf %186, %185 : vector<8x128xf32>
    %188 = arith.mulf %182, %187 : vector<8x128xf32>
    %189 = arith.truncf %188 : vector<8x128xf32> to vector<8x128xbf16>
    %c0_77 = arith.constant 0 : index
    %c0_78 = arith.constant 0 : index
    %190 = vector.load %arg12[%c0_77, %c0_78] : memref<128x32xbf16, #tpu.memory_space<vmem>>, vector<128x32xbf16>
    %cst_79 = arith.constant dense<0.000000e+00> : vector<8x32xf32>
    %191 = tpu.matmul %189, %190, %cst_79 {dimension_numbers = #tpu.dot_dimension_numbers<[1], [0], [0], [1], [0, 0, 1, 1], [], []>} : vector<8x128xbf16>, vector<128x32xbf16>, vector<8x32xf32> -> vector<8x32xf32>
    %c0_80 = arith.constant 0 : index
    %c0_81 = arith.constant 0 : index
    %192 = vector.load %arg13[%c0_80, %c0_81] : memref<1x32xf32, #tpu.memory_space<vmem>>, vector<1x32xf32>
    %193 = vector.broadcast %192 : vector<1x32xf32> to vector<8x32xf32>
    %194 = arith.addf %191, %193 : vector<8x32xf32>
    %195 = arith.addf %150, %194 : vector<8x32xf32>
    %196 = vector.shape_cast %195 : vector<8x32xf32> to vector<2x4x32xf32>
    %c0_82 = arith.constant 0 : index
    %c0_83 = arith.constant 0 : index
    %c0_84 = arith.constant 0 : index
    %197 = vector.load %arg14[%c0_82, %c0_83, %c0_84] : memref<2x4x32xf32, #tpu.memory_space<vmem>>, vector<2x4x32xf32>
    tpu.vector_store %arg14[%c0_82, %c0_83, %c0_84], %196 {strides = array<i32>} : memref<2x4x32xf32, #tpu.memory_space<vmem>>, vector<2x4x32xf32>,
    return
  }
  func.func @transform_0(%arg0: i32) -> (i32, i32, i32) {
    %c0_i32 = arith.constant 0 : i32
    %c0_i32_0 = arith.constant 0 : i32
    %c0_i32_1 = arith.constant 0 : i32
    return %arg0, %c0_i32, %c0_i32_0 : i32, i32, i32
  }
  func.func @transform_1(%arg0: i32) -> (i32, i32) {
    %c0_i32 = arith.constant 0 : i32
    %c0_i32_0 = arith.constant 0 : i32
    %c0_i32_1 = arith.constant 0 : i32
    return %c0_i32, %c0_i32_0 : i32, i32
  }
  func.func @transform_2(%arg0: i32) -> (i32, i32) {
    %c0_i32 = arith.constant 0 : i32
    %c0_i32_0 = arith.constant 0 : i32
    %c0_i32_1 = arith.constant 0 : i32
    return %c0_i32, %c0_i32_0 : i32, i32
  }
  func.func @transform_3(%arg0: i32) -> (i32, i32) {
    %c0_i32 = arith.constant 0 : i32
    %c0_i32_0 = arith.constant 0 : i32
    %c0_i32_1 = arith.constant 0 : i32
    return %c0_i32, %c0_i32_0 : i32, i32
  }
  func.func @transform_4(%arg0: i32) -> (i32, i32) {
    %c0_i32 = arith.constant 0 : i32
    %c0_i32_0 = arith.constant 0 : i32
    %c0_i32_1 = arith.constant 0 : i32
    return %c0_i32, %c0_i32_0 : i32, i32
  }
  func.func @transform_5(%arg0: i32) -> (i32, i32) {
    %c0_i32 = arith.constant 0 : i32
    %c0_i32_0 = arith.constant 0 : i32
    %c0_i32_1 = arith.constant 0 : i32
    return %c0_i32, %c0_i32_0 : i32, i32
  }
  func.func @transform_6(%arg0: i32) -> (i32, i32) {
    %c0_i32 = arith.constant 0 : i32
    %c0_i32_0 = arith.constant 0 : i32
    %c0_i32_1 = arith.constant 0 : i32
    return %c0_i32, %c0_i32_0 : i32, i32
  }
  func.func @transform_7(%arg0: i32) -> (i32, i32) {
    %c0_i32 = arith.constant 0 : i32
    %c0_i32_0 = arith.constant 0 : i32
    %c0_i32_1 = arith.constant 0 : i32
    return %c0_i32, %c0_i32_0 : i32, i32
  }
  func.func @transform_8(%arg0: i32) -> (i32, i32) {
    %c0_i32 = arith.constant 0 : i32
    %c0_i32_0 = arith.constant 0 : i32
    %c0_i32_1 = arith.constant 0 : i32
    return %c0_i32, %c0_i32_0 : i32, i32
  }
  func.func @transform_9(%arg0: i32) -> (i32, i32) {
    %c0_i32 = arith.constant 0 : i32
    %c0_i32_0 = arith.constant 0 : i32
    %c0_i32_1 = arith.constant 0 : i32
    return %c0_i32, %c0_i32_0 : i32, i32
  }
  func.func @transform_10(%arg0: i32) -> (i32, i32) {
    %c0_i32 = arith.constant 0 : i32
    %c0_i32_0 = arith.constant 0 : i32
    %c0_i32_1 = arith.constant 0 : i32
    return %c0_i32, %c0_i32_0 : i32, i32
  }
  func.func @transform_11(%arg0: i32) -> (i32, i32) {
    %c0_i32 = arith.constant 0 : i32
    %c0_i32_0 = arith.constant 0 : i32
    %c0_i32_1 = arith.constant 0 : i32
    return %c0_i32, %c0_i32_0 : i32, i32
  }
  func.func @transform_12(%arg0: i32) -> (i32, i32) {
    %c0_i32 = arith.constant 0 : i32
    %c0_i32_0 = arith.constant 0 : i32
    %c0_i32_1 = arith.constant 0 : i32
    return %c0_i32, %c0_i32_0 : i32, i32
  }
  func.func @transform_13(%arg0: i32) -> (i32, i32, i32) {
    %c0_i32 = arith.constant 0 : i32
    %c0_i32_0 = arith.constant 0 : i32
    %c0_i32_1 = arith.constant 0 : i32
    return %arg0, %c0_i32, %c0_i32_0 : i32, i32, i32
  }
}

</mosaic_0001>

<llo_original>
// kernel: tpu_custom_call.1
$region0: #{tpu_custom_call.1}
  #allocation0 [shape = 'u32[]', space=smem, size = 0x4, offset = 0x4, fixed_abs, tag = 'smem constant byte address 0x4 - core index']
  #allocation1 [shape = 'u32[72,128]{1,0:T(1,128)}', space=vmem, size = 0x9000, scoped, tag = 'internal scratch']
  #allocation2 [shape = 'bf16[2,4,4,8]{3,2,1,0:T(4,128)(2,1)}', space=vmem, size = 0x2000, scoped, tag = 'scratch operand']
  #allocation3 [shape = 'bf16[8,32]{1,0:T(8,128)(2,1)}', space=vmem, size = 0x800, scoped, tag = 'scratch operand']
  %s0 = inlined_call_operand.vmem [shape: f32[8,4,32], index: 0, kind: input, shape index: {}]
  %s1 = inlined_call_operand.hbm [shape: f32[1,32], index: 1, kind: input, shape index: {}]
  %s2 = inlined_call_operand.vmem [shape: f32[1,32], index: 2, kind: input, shape index: {}]
  %s3 = inlined_call_operand.vmem [shape: bf16[32,96], index: 3, kind: input, shape index: {}]
  %s4 = inlined_call_operand.vmem [shape: f32[1,96], index: 4, kind: input, shape index: {}]
  %s5 = inlined_call_operand.vmem [shape: bf16[32,32], index: 5, kind: input, shape index: {}]
  %s6 = inlined_call_operand.vmem [shape: f32[1,32], index: 6, kind: input, shape index: {}]
  %s7 = inlined_call_operand.vmem [shape: f32[1,32], index: 7, kind: input, shape index: {}]
  %s8 = inlined_call_operand.vmem [shape: f32[1,32], index: 8, kind: input, shape index: {}]
  %s9 = inlined_call_operand.vmem [shape: bf16[32,128], index: 9, kind: input, shape index: {}]
  %s10 = inlined_call_operand.vmem [shape: f32[1,128], index: 10, kind: input, shape index: {}]
  %s11 = inlined_call_operand.vmem [shape: bf16[128,32], index: 11, kind: input, shape index: {}]
  %s12 = inlined_call_operand.vmem [shape: f32[1,32], index: 12, kind: input, shape index: {}]
  %s13 = inlined_call_operand.hbm [shape: f32[8,4,32], index: 13, kind: output, shape index: {}]
  %s14 = sld [smem:[#allocation0]]
  $region89: #{tpu_custom_call.1} parent=0
    _
  %s16 = ssub.s32 1, %s14
  %s17 = scalar_select 0, %s16, %s14
  $region1: #{tpu_custom_call.1} parent=0
    #allocation4 [shape = 'u8[512]{0}', space=vmem, size = 0x400, scoped, tag = 'input window, operand 1, single buffered']
    #allocation5 [shape = 's32[2]{0}', space=sflag, size = 0x8, scoped, tag = 'scoped memory for tpu_custom_call.1']
    #allocation6 [shape = 's32[2]{0}', space=sflag, size = 0x8, scoped, tag = 'scoped memory for tpu_custom_call.1']
    #allocation7 [shape = 'u8[8192]{0}', space=vmem, size = 0x2000, scoped, tag = 'output window, operand 0']
    %18 = vsyncpa [#allocation5], 0
    %19 = vsyncpa [#allocation6], 0
    %s20 = scalar_lea.sflag [#allocation6], 1
    %21 = vsyncpa %s20, 0
    loop: start=0, step=1, limit=6
    $region2: #{tpu_custom_call.1} parent=1 // loop_pre_header
      _
    $region3: #{tpu_custom_call.1} parent=1 // loop_header
      %s23 = sphi 0, %s27
      %p24 = scmp.ge.s32.totalorder %s23, 6
      %s33 = sphi 0, %s35
      %s36 = sphi 0, %s33
      %s37 = sphi 0, %s36
      %s53 = sphi 0, %s37
      %s57 = sphi 0, %s57
      %s59 = sphi 0, %s57
      %s60 = sphi 0, %s59
      %s74 = sphi 0, %s60
      %s78 = sphi 0, %s78
      %s80 = sphi 0, %s78
      %s81 = sphi 0, %s80
      %s95 = sphi 0, %s81
      %s99 = sphi 0, %s99
      %s101 = sphi 0, %s99
      %s102 = sphi 0, %s101
      %s116 = sphi 0, %s102
      %s120 = sphi 0, %s120
      %s122 = sphi 0, %s120
      %s123 = sphi 0, %s122
      %s137 = sphi 0, %s123
      %s141 = sphi 0, %s141
      %s143 = sphi 0, %s141
      %s144 = sphi 0, %s143
      %s158 = sphi 0, %s144
      %s162 = sphi 0, %s162
      %s164 = sphi 0, %s162
      %s165 = sphi 0, %s164
      %s179 = sphi 0, %s165
      %s183 = sphi 0, %s183
      %s185 = sphi 0, %s183
      %s186 = sphi 0, %s185
      %s200 = sphi 0, %s186
      %s204 = sphi 0, %s204
      %s206 = sphi 0, %s204
      %s207 = sphi 0, %s206
      %s221 = sphi 0, %s207
      %s225 = sphi 0, %s225
      %s227 = sphi 0, %s225
      %s228 = sphi 0, %s227
      %s242 = sphi 0, %s228
      %s246 = sphi 0, %s246
      %s248 = sphi 0, %s246
      %s249 = sphi 0, %s248
      %s263 = sphi 0, %s249
      %s267 = sphi 0, %s267
      %s269 = sphi 0, %s267
      %s270 = sphi 0, %s269
      %s284 = sphi 0, %s270
      %s288 = sphi 0, %s288
      %s290 = sphi 0, %s288
      %s291 = sphi 0, %s290
      %s305 = sphi 0, %s291
      %s311 = sphi 0, %s313
      %s314 = sphi 0, %s311
      %s315 = sphi 0, %s314
      %s331 = sphi 0, %s315
    $region4: #{tpu_custom_call.1} parent=1 // loop_header_branch
      %26 = sbr.rel (%p24) target = $region8
    $region5: #{tpu_custom_call.1} parent=1 // loop_body
      %s28 = ssub.s32 %s23, 1
      %s29 = ssub.s32 %s23, 2
      %s30 = sadd.s32 %s23, 1
      %s31 = ssub.s32 %s23, %s30
      %p32 = scmp.eq.s32.totalorder %s31, 0
      %s34 = sadd.s32 %s33, 1
      %s35 = scalar_select %p32, %s33, %s34
      %p38 = pneg %p32
      %p39 = scmp.eq.s32.totalorder %s23, 3
      %p40 = por %p38, %p39
      %p41 = scmp.ne.s32.totalorder %s33, %s36
      %p42 = scmp.eq.s32.totalorder %s23, 0
      %p43 = por %p41, %p42
      %p44 = scmp.ne.s32.totalorder %s33, %s36
      %p45 = scmp.eq.s32.totalorder %s28, 3
      %p46 = por %p44, %p45
      %p47 = scmp.ne.s32.totalorder %s36, %s37
      %p48 = scmp.eq.s32.totalorder %s28, 0
      %p49 = por %p47, %p48
      %p50 = scmp.ne.s32.totalorder %s36, %s37
      %p51 = scmp.eq.s32.totalorder %s29, 3
      %p52 = por %p50, %p51
      %p54 = scmp.ne.s32.totalorder %s37, %s53
      %p55 = scmp.eq.s32.totalorder %s29, 0
      %p56 = por %p54, %p55
      %s58 = sadd.s32 %s57, 1
      %p61 = scmp.eq.s32.totalorder %s23, 3
      %p62 = scmp.ne.s32.totalorder %s57, %s59
      %p63 = scmp.eq.s32.totalorder %s23, 0
      %p64 = por %p62, %p63
      %p65 = scmp.ne.s32.totalorder %s57, %s59
      %p66 = scmp.eq.s32.totalorder %s28, 3
      %p67 = por %p65, %p66
      %p68 = scmp.ne.s32.totalorder %s59, %s60
      %p69 = scmp.eq.s32.totalorder %s28, 0
      %p70 = por %p68, %p69
      %p71 = scmp.ne.s32.totalorder %s59, %s60
      %p72 = scmp.eq.s32.totalorder %s29, 3
      %p73 = por %p71, %p72
      %p75 = scmp.ne.s32.totalorder %s60, %s74
      %p76 = scmp.eq.s32.totalorder %s29, 0
      %p77 = por %p75, %p76
      %s79 = sadd.s32 %s78, 1
      %p82 = scmp.eq.s32.totalorder %s23, 3
      %p83 = scmp.ne.s32.totalorder %s78, %s80
      %p84 = scmp.eq.s32.totalorder %s23, 0
      %p85 = por %p83, %p84
      %p86 = scmp.ne.s32.totalorder %s78, %s80
      %p87 = scmp.eq.s32.totalorder %s28, 3
      %p88 = por %p86, %p87
      %p89 = scmp.ne.s32.totalorder %s80, %s81
      %p90 = scmp.eq.s32.totalorder %s28, 0
      %p91 = por %p89, %p90
      %p92 = scmp.ne.s32.totalorder %s80, %s81
      %p93 = scmp.eq.s32.totalorder %s29, 3
      %p94 = por %p92, %p93
      %p96 = scmp.ne.s32.totalorder %s81, %s95
      %p97 = scmp.eq.s32.totalorder %s29, 0
      %p98 = por %p96, %p97
      %s100 = sadd.s32 %s99, 1
      %p103 = scmp.eq.s32.totalorder %s23, 3
      %p104 = scmp.ne.s32.totalorder %s99, %s101
      %p105 = scmp.eq.s32.totalorder %s23, 0
      %p106 = por %p104, %p105
      %p107 = scmp.ne.s32.totalorder %s99, %s101
      %p108 = scmp.eq.s32.totalorder %s28, 3
      %p109 = por %p107, %p108
      %p110 = scmp.ne.s32.totalorder %s101, %s102
      %p111 = scmp.eq.s32.totalorder %s28, 0
      %p112 = por %p110, %p111
      %p113 = scmp.ne.s32.totalorder %s101, %s102
      %p114 = scmp.eq.s32.totalorder %s29, 3
      %p115 = por %p113, %p114
      %p117 = scmp.ne.s32.totalorder %s102, %s116
      %p118 = scmp.eq.s32.totalorder %s29, 0
      %p119 = por %p117, %p118
      %s121 = sadd.s32 %s120, 1
      %p124 = scmp.eq.s32.totalorder %s23, 3
      %p125 = scmp.ne.s32.totalorder %s120, %s122
      %p126 = scmp.eq.s32.totalorder %s23, 0
      %p127 = por %p125, %p126
      %p128 = scmp.ne.s32.totalorder %s120, %s122
      %p129 = scmp.eq.s32.totalorder %s28, 3
      %p130 = por %p128, %p129
      %p131 = scmp.ne.s32.totalorder %s122, %s123
      %p132 = scmp.eq.s32.totalorder %s28, 0
      %p133 = por %p131, %p132
      %p134 = scmp.ne.s32.totalorder %s122, %s123
      %p135 = scmp.eq.s32.totalorder %s29, 3
      %p136 = por %p134, %p135
      %p138 = scmp.ne.s32.totalorder %s123, %s137
      %p139 = scmp.eq.s32.totalorder %s29, 0
      %p140 = por %p138, %p139
      %s142 = sadd.s32 %s141, 1
      %p145 = scmp.eq.s32.totalorder %s23, 3
      %p146 = scmp.ne.s32.totalorder %s141, %s143
      %p147 = scmp.eq.s32.totalorder %s23, 0
      %p148 = por %p146, %p147
      %p149 = scmp.ne.s32.totalorder %s141, %s143
      %p150 = scmp.eq.s32.totalorder %s28, 3
      %p151 = por %p149, %p150
      %p152 = scmp.ne.s32.totalorder %s143, %s144
      %p153 = scmp.eq.s32.totalorder %s28, 0
      %p154 = por %p152, %p153
      %p155 = scmp.ne.s32.totalorder %s143, %s144
      %p156 = scmp.eq.s32.totalorder %s29, 3
      %p157 = por %p155, %p156
      %p159 = scmp.ne.s32.totalorder %s144, %s158
      %p160 = scmp.eq.s32.totalorder %s29, 0
      %p161 = por %p159, %p160
      %s163 = sadd.s32 %s162, 1
      %p166 = scmp.eq.s32.totalorder %s23, 3
      %p167 = scmp.ne.s32.totalorder %s162, %s164
      %p168 = scmp.eq.s32.totalorder %s23, 0
      %p169 = por %p167, %p168
      %p170 = scmp.ne.s32.totalorder %s162, %s164
      %p171 = scmp.eq.s32.totalorder %s28, 3
      %p172 = por %p170, %p171
      %p173 = scmp.ne.s32.totalorder %s164, %s165
      %p174 = scmp.eq.s32.totalorder %s28, 0
      %p175 = por %p173, %p174
      %p176 = scmp.ne.s32.totalorder %s164, %s165
      %p177 = scmp.eq.s32.totalorder %s29, 3
      %p178 = por %p176, %p177
      %p180 = scmp.ne.s32.totalorder %s165, %s179
      %p181 = scmp.eq.s32.totalorder %s29, 0
      %p182 = por %p180, %p181
      %s184 = sadd.s32 %s183, 1
      %p187 = scmp.eq.s32.totalorder %s23, 3
      %p188 = scmp.ne.s32.totalorder %s183, %s185
      %p189 = scmp.eq.s32.totalorder %s23, 0
      %p190 = por %p188, %p189
      %p191 = scmp.ne.s32.totalorder %s183, %s185
      %p192 = scmp.eq.s32.totalorder %s28, 3
      %p193 = por %p191, %p192
      %p194 = scmp.ne.s32.totalorder %s185, %s186
      %p195 = scmp.eq.s32.totalorder %s28, 0
      %p196 = por %p194, %p195
      %p197 = scmp.ne.s32.totalorder %s185, %s186
      %p198 = scmp.eq.s32.totalorder %s29, 3
      %p199 = por %p197, %p198
      %p201 = scmp.ne.s32.totalorder %s186, %s200
      %p202 = scmp.eq.s32.totalorder %s29, 0
      %p203 = por %p201, %p202
      %s205 = sadd.s32 %s204, 1
      %p208 = scmp.eq.s32.totalorder %s23, 3
      %p209 = scmp.ne.s32.totalorder %s204, %s206
      %p210 = scmp.eq.s32.totalorder %s23, 0
      %p211 = por %p209, %p210
      %p212 = scmp.ne.s32.totalorder %s204, %s206
      %p213 = scmp.eq.s32.totalorder %s28, 3
      %p214 = por %p212, %p213
      %p215 = scmp.ne.s32.totalorder %s206, %s207
      %p216 = scmp.eq.s32.totalorder %s28, 0
      %p217 = por %p215, %p216
      %p218 = scmp.ne.s32.totalorder %s206, %s207
      %p219 = scmp.eq.s32.totalorder %s29, 3
      %p220 = por %p218, %p219
      %p222 = scmp.ne.s32.totalorder %s207, %s221
      %p223 = scmp.eq.s32.totalorder %s29, 0
      %p224 = por %p222, %p223
      %s226 = sadd.s32 %s225, 1
      %p229 = scmp.eq.s32.totalorder %s23, 3
      %p230 = scmp.ne.s32.totalorder %s225, %s227
      %p231 = scmp.eq.s32.totalorder %s23, 0
      %p232 = por %p230, %p231
      %p233 = scmp.ne.s32.totalorder %s225, %s227
      %p234 = scmp.eq.s32.totalorder %s28, 3
      %p235 = por %p233, %p234
      %p236 = scmp.ne.s32.totalorder %s227, %s228
      %p237 = scmp.eq.s32.totalorder %s28, 0
      %p238 = por %p236, %p237
      %p239 = scmp.ne.s32.totalorder %s227, %s228
      %p240 = scmp.eq.s32.totalorder %s29, 3
      %p241 = por %p239, %p240
      %p243 = scmp.ne.s32.totalorder %s228, %s242
      %p244 = scmp.eq.s32.totalorder %s29, 0
      %p245 = por %p243, %p244
      %s247 = sadd.s32 %s246, 1
      %p250 = scmp.eq.s32.totalorder %s23, 3
      %p251 = scmp.ne.s32.totalorder %s246, %s248
      %p252 = scmp.eq.s32.totalorder %s23, 0
      %p253 = por %p251, %p252
      %p254 = scmp.ne.s32.totalorder %s246, %s248
      %p255 = scmp.eq.s32.totalorder %s28, 3
      %p256 = por %p254, %p255
      %p257 = scmp.ne.s32.totalorder %s248, %s249
      %p258 = scmp.eq.s32.totalorder %s28, 0
      %p259 = por %p257, %p258
      %p260 = scmp.ne.s32.totalorder %s248, %s249
      %p261 = scmp.eq.s32.totalorder %s29, 3
      %p262 = por %p260, %p261
      %p264 = scmp.ne.s32.totalorder %s249, %s263
      %p265 = scmp.eq.s32.totalorder %s29, 0
      %p266 = por %p264, %p265
      %s268 = sadd.s32 %s267, 1
      %p271 = scmp.eq.s32.totalorder %s23, 3
      %p272 = scmp.ne.s32.totalorder %s267, %s269
      %p273 = scmp.eq.s32.totalorder %s23, 0
      %p274 = por %p272, %p273
      %p275 = scmp.ne.s32.totalorder %s267, %s269
      %p276 = scmp.eq.s32.totalorder %s28, 3
      %p277 = por %p275, %p276
      %p278 = scmp.ne.s32.totalorder %s269, %s270
      %p279 = scmp.eq.s32.totalorder %s28, 0
      %p280 = por %p278, %p279
      %p281 = scmp.ne.s32.totalorder %s269, %s270
      %p282 = scmp.eq.s32.totalorder %s29, 3
      %p283 = por %p281, %p282
      %p285 = scmp.ne.s32.totalorder %s270, %s284
      %p286 = scmp.eq.s32.totalorder %s29, 0
      %p287 = por %p285, %p286
      %s289 = sadd.s32 %s288, 1
      %p292 = scmp.eq.s32.totalorder %s23, 3
      %p293 = scmp.ne.s32.totalorder %s288, %s290
      %p294 = scmp.eq.s32.totalorder %s23, 0
      %p295 = por %p293, %p294
      %p296 = scmp.ne.s32.totalorder %s288, %s290
      %p297 = scmp.eq.s32.totalorder %s28, 3
      %p298 = por %p296, %p297
      %p299 = scmp.ne.s32.totalorder %s290, %s291
      %p300 = scmp.eq.s32.totalorder %s28, 0
      %p301 = por %p299, %p300
      %p302 = scmp.ne.s32.totalorder %s290, %s291
      %p303 = scmp.eq.s32.totalorder %s29, 3
      %p304 = por %p302, %p303
      %p306 = scmp.ne.s32.totalorder %s291, %s305
      %p307 = scmp.eq.s32.totalorder %s29, 0
      %p308 = por %p306, %p307
      %s309 = ssub.s32 %s23, %s30
      %p310 = scmp.eq.s32.totalorder %s309, 0
      %s312 = sadd.s32 %s311, 1
      %s313 = scalar_select %p310, %s311, %s312
      %p316 = pneg %p310
      %p317 = scmp.eq.s32.totalorder %s23, 3
      %p318 = por %p316, %p317
      %p319 = scmp.ne.s32.totalorder %s311, %s314
      %p320 = scmp.eq.s32.totalorder %s23, 0
      %p321 = por %p319, %p320
      %p322 = scmp.ne.s32.totalorder %s311, %s314
      %p323 = scmp.eq.s32.totalorder %s28, 3
      %p324 = por %p322, %p323
      %p325 = scmp.ne.s32.totalorder %s314, %s315
      %p326 = scmp.eq.s32.totalorder %s28, 0
      %p327 = por %p325, %p326
      %p328 = scmp.ne.s32.totalorder %s314, %s315
      %p329 = scmp.eq.s32.totalorder %s29, 3
      %p330 = por %p328, %p329
      %p332 = scmp.ne.s32.totalorder %s315, %s331
      %p333 = scmp.eq.s32.totalorder %s29, 0
      %p334 = por %p332, %p333
      %p335 = scmp.le.s32.totalorder 1, %s23
      %p336 = scmp.lt.s32.totalorder %s23, 5
      %p337 = pnand %p335, %p336
      %p338 = pneg %p337
      // Predicated region
      $region9: #{tpu_custom_call.1} parent=5 // pred_check
        _
      $region10: #{tpu_custom_call.1} parent=5 // pred_check_branch
        %340 = sbr.rel (%p337) target = $region12
      $region11: #{tpu_custom_call.1} parent=5 // pred_region
        %s341 = ssub.s32 %s23, 1
        // Predicated region
        $region13: #{tpu_custom_call.1} parent=11 // pred_check
          %p342 = pneg %p70
        $region14: #{tpu_custom_call.1} parent=11 // pred_check_branch
          %344 = sbr.rel (%p342) target = $region16
        $region15: #{tpu_custom_call.1} parent=11 // pred_region
          %346 = vsyncadd [#allocation5], 0
          %s348 = sshll.u32 %s1, 4
          %s349 = int_to_ptr.hbm [resolvable:$true] %s348
          %s350 = sshll.u32 [#allocation4], 4
          %s351 = int_to_ptr.vmem [resolvable:$true] %s350
          %353 = dma.hbm_to_vmem [thread:$0]  %s349, 16, %s351, [#allocation5]
        $region16: #{tpu_custom_call.1} parent=11 // pred_fallthru
          _
        // Predicated region
        $region17: #{tpu_custom_call.1} parent=11 // pred_check
          %p354 = pneg %p91
        $region18: #{tpu_custom_call.1} parent=11 // pred_check_branch
          %356 = sbr.rel (%p354) target = $region20
        $region19: #{tpu_custom_call.1} parent=11 // pred_region
          _
        $region20: #{tpu_custom_call.1} parent=11 // pred_fallthru
          _
        // Predicated region
        $region21: #{tpu_custom_call.1} parent=11 // pred_check
          %p357 = pneg %p112
        $region22: #{tpu_custom_call.1} parent=11 // pred_check_branch
          %359 = sbr.rel (%p357) target = $region24
        $region23: #{tpu_custom_call.1} parent=11 // pred_region
          _
        $region24: #{tpu_custom_call.1} parent=11 // pred_fallthru
          _
        // Predicated region
        $region25: #{tpu_custom_call.1} parent=11 // pred_check
          %p360 = pneg %p133
        $region26: #{tpu_custom_call.1} parent=11 // pred_check_branch
          %362 = sbr.rel (%p360) target = $region28
        $region27: #{tpu_custom_call.1} parent=11 // pred_region
          _
        $region28: #{tpu_custom_call.1} parent=11 // pred_fallthru
          _
        // Predicated region
        $region29: #{tpu_custom_call.1} parent=11 // pred_check
          %p363 = pneg %p154
        $region30: #{tpu_custom_call.1} parent=11 // pred_check_branch
          %365 = sbr.rel (%p363) target = $region32
        $region31: #{tpu_custom_call.1} parent=11 // pred_region
          _
        $region32: #{tpu_custom_call.1} parent=11 // pred_fallthru
          _
        // Predicated region
        $region33: #{tpu_custom_call.1} parent=11 // pred_check
          %p366 = pneg %p175
        $region34: #{tpu_custom_call.1} parent=11 // pred_check_branch
          %368 = sbr.rel (%p366) target = $region36
        $region35: #{tpu_custom_call.1} parent=11 // pred_region
          _
        $region36: #{tpu_custom_call.1} parent=11 // pred_fallthru
          _
        // Predicated region
        $region37: #{tpu_custom_call.1} parent=11 // pred_check
          %p369 = pneg %p196
        $region38: #{tpu_custom_call.1} parent=11 // pred_check_branch
          %371 = sbr.rel (%p369) target = $region40
        $region39: #{tpu_custom_call.1} parent=11 // pred_region
          _
        $region40: #{tpu_custom_call.1} parent=11 // pred_fallthru
          _
        // Predicated region
        $region41: #{tpu_custom_call.1} parent=11 // pred_check
          %p372 = pneg %p217
        $region42: #{tpu_custom_call.1} parent=11 // pred_check_branch
          %374 = sbr.rel (%p372) target = $region44
        $region43: #{tpu_custom_call.1} parent=11 // pred_region
          _
        $region44: #{tpu_custom_call.1} parent=11 // pred_fallthru
          _
        // Predicated region
        $region45: #{tpu_custom_call.1} parent=11 // pred_check
          %p375 = pneg %p238
        $region46: #{tpu_custom_call.1} parent=11 // pred_check_branch
          %377 = sbr.rel (%p375) target = $region48
        $region47: #{tpu_custom_call.1} parent=11 // pred_region
          _
        $region48: #{tpu_custom_call.1} parent=11 // pred_fallthru
          _
        // Predicated region
        $region49: #{tpu_custom_call.1} parent=11 // pred_check
          %p378 = pneg %p259
        $region50: #{tpu_custom_call.1} parent=11 // pred_check_branch
          %380 = sbr.rel (%p378) target = $region52
        $region51: #{tpu_custom_call.1} parent=11 // pred_region
          _
        $region52: #{tpu_custom_call.1} parent=11 // pred_fallthru
          _
        // Predicated region
        $region53: #{tpu_custom_call.1} parent=11 // pred_check
          %p381 = pneg %p280
        $region54: #{tpu_custom_call.1} parent=11 // pred_check_branch
          %383 = sbr.rel (%p381) target = $region56
        $region55: #{tpu_custom_call.1} parent=11 // pred_region
          _
        $region56: #{tpu_custom_call.1} parent=11 // pred_fallthru
          _
        // Predicated region
        $region57: #{tpu_custom_call.1} parent=11 // pred_check
          %p384 = pneg %p301
        $region58: #{tpu_custom_call.1} parent=11 // pred_check_branch
          %386 = sbr.rel (%p384) target = $region60
        $region59: #{tpu_custom_call.1} parent=11 // pred_region
          _
        $region60: #{tpu_custom_call.1} parent=11 // pred_fallthru
          _
      $region12: #{tpu_custom_call.1} parent=5 // pred_fallthru
        _
      %p387 = scmp.lt.s32.totalorder %s23, 4
      // Predicated region
      $region61: #{tpu_custom_call.1} parent=5 // pred_check
        %p388 = pneg %p387
      $region62: #{tpu_custom_call.1} parent=5 // pred_check_branch
        %390 = sbr.rel (%p388) target = $region64
      $region63: #{tpu_custom_call.1} parent=5 // pred_region
        // Predicated region
        $region65: #{tpu_custom_call.1} parent=63 // pred_check
          %p391 = pneg %p43
        $region66: #{tpu_custom_call.1} parent=63 // pred_check_branch
          %393 = sbr.rel (%p391) target = $region68
        $region67: #{tpu_custom_call.1} parent=63 // pred_region
          %s394 = smul.u32 2, %s23
          %p395 = scmp.lt.s32.totalorder %s394, 7
          %s396 = scalar_select %p395, %s394, 7
          %s397 = smul.addr %s396, 4
          %s398 = scalar_lea.vmem %s0, %s397
          %s399 = smul.u32 2, %s23
        $region68: #{tpu_custom_call.1} parent=63 // pred_fallthru
          _
      $region64: #{tpu_custom_call.1} parent=5 // pred_fallthru
        _
      %p400 = scmp.le.s32.totalorder 1, %s23
      %p401 = scmp.lt.s32.totalorder %s23, 5
      %p402 = pnand %p400, %p401
      %p403 = pneg %p402
      // Predicated region
      $region69: #{tpu_custom_call.1} parent=5 // pred_check
        _
      $region70: #{tpu_custom_call.1} parent=5 // pred_check_branch
        %405 = sbr.rel (%p402) target = $region72
      $region71: #{tpu_custom_call.1} parent=5 // pred_region
        %s406 = ssub.s32 %s23, 1
        // Predicated region
        $region73: #{tpu_custom_call.1} parent=71 // pred_check
          %p407 = pneg %p70
        $region74: #{tpu_custom_call.1} parent=71 // pred_check_branch
          %409 = sbr.rel (%p407) target = $region76
        $region75: #{tpu_custom_call.1} parent=71 // pred_region
          %411 = dma.done [#allocation5], 16
        $region76: #{tpu_custom_call.1} parent=71 // pred_fallthru
          _
        %s412 = smul.u32 2, %s28
        %p413 = scmp.lt.s32.totalorder %s412, 7
        %s414 = scalar_select %p413, %s412, 7
        %s415 = smul.addr %s414, 4
        %s416 = scalar_lea.vmem %s0, %s415
        %p417 = pneg %p49
        %p418 = pneg %p46
        %p419 = pneg %p70
        %p420 = pneg %p67
        %p421 = pneg %p91
        %p422 = pneg %p88
        %p423 = pneg %p112
        %p424 = pneg %p109
        %p425 = pneg %p133
        %p426 = pneg %p130
        %p427 = pneg %p154
        %p428 = pneg %p151
        %p429 = pneg %p175
        %p430 = pneg %p172
        %p431 = pneg %p196
        %p432 = pneg %p193
        %p433 = pneg %p217
        %p434 = pneg %p214
        %p435 = pneg %p238
        %p436 = pneg %p235
        %p437 = pneg %p259
        %p438 = pneg %p256
        %p439 = pneg %p280
        %p440 = pneg %p277
        %p441 = pneg %p301
        %p442 = pneg %p298
        %p443 = pneg %p327
        %p444 = pneg %p324
        %s445 = sand.u32 %s314, 1
        %s446 = scalar_lea.sflag [#allocation6], %s445
        %s447 = sand.u32 %s314, 1
        %s448 = smul.addr %s447, 8
        %s449 = scalar_lea.vmem [#allocation7], %s448
        %s450 = smul.u32 2, %s28
        %p451 = scmp.lt.s32.totalorder %s450, 7
        %s452 = scalar_select %p451, %s450, 7
        %s453 = smul.addr %s452, 4
        %s454 = scalar_lea.vmem %s0, %s453
        %s455 = smul.u32 2, %s28
        %s456 = smul.u32 2, %s28
        %v458 = vld [vmem:[%s454] sm:$0xf]
        %v459 = vld [vmem:[%s454 + $0x4] sm:$0xf]
        %v460 = vld [vmem:[#allocation4] sm:$0x1]
        %v461 = vld [vmem:[%s2] sm:$0x1]
        %464 = vst [vmem:[#allocation1] ss:$2 sm:$0xff] %v458
        %s465 = scalar_lea.vmem [#allocation1], 1
        %466 = vst [vmem:[%s465] ss:$2 sm:$0xff] %v459
        %v467 = vld.sshfl [vmem:[#allocation1] sm:$0xff pattern:$0x75316420]
        %vm469 = vcmask 261120
        %v470 = vsel %vm469, %v467, 0.0
        %471 = vadd.xlane.f32.xlu0 %v470
        %v472 = vpop.xlane.xlu0 %471
        %v473 = vrcp.pop 32.0
        %v474 = vmul.f32 32.0, %v473
        %v475 = vsub.f32 1.0, %v474
        %v476 = vmul.f32 %v473, %v475
        %v477 = vadd.f32 %v473, %v476
        %vm478 = vweird.f32 %v473
        %v479 = vsel %vm478, %v473, %v477
        %v480 = vmul.f32 %v472, %v479
        %v483 = vunpack.c.l.s4 839922192
        %v484 = vunpack.c.0.s8 %v483
        %v485 = vperm.slane %v480, %v484
        %v487 = vunpack.c.l.s4 1985246804
        %v488 = vunpack.c.0.s8 %v487
        %v489 = vperm.slane %v480, %v488
        %v492 = vsub.f32 %v458, %v485
        %v493 = vsub.f32 %v459, %v489
        %v494 = vmul.f32 %v492, %v492
        %v495 = vmul.f32 %v493, %v493
        %498 = vst [vmem:[#allocation1] ss:$2 sm:$0xff] %v494
        %s499 = scalar_lea.vmem [#allocation1], 1
        %500 = vst [vmem:[%s499] ss:$2 sm:$0xff] %v495
        %v501 = vld.sshfl [vmem:[#allocation1] sm:$0xff pattern:$0x75316420]
        %v503 = vsel %vm469, %v501, 0.0
        %504 = vadd.xlane.f32.xlu0 %v503
        %v505 = vpop.xlane.xlu0 %504
        %v506 = vmul.f32 %v505, %v479
        %v507 = vadd.f32 %v506, 1e-06
        %v508 = vrsqrt.pop %v507
        %v509 = vmul.f32 %v508, %v507
        %v510 = vmul.f32 %v509, %v508
        %v511 = vmul.f32 0.5, %v510
        %v512 = vsub.f32 1.5, %v511
        %v513 = vmul.f32 %v508, %v512
        %vm514 = vweird.f32 %v507
        %vm515 = vweird.f32 %v508
        %vm516 = vmor %vm514, %vm515
        %v517 = vsel %vm516, %v508, %v513
        %v520 = vunpack.c.l.s4 839922192
        %v521 = vunpack.c.0.s8 %v520
        %v522 = vperm.slane %v517, %v521
        %v524 = vunpack.c.l.s4 1985246804
        %v525 = vunpack.c.0.s8 %v524
        %v526 = vperm.slane %v517, %v525
        %v529 = vmul.f32 %v492, %v522
        %v530 = vmul.f32 %v493, %v526
        %v532 = vperm.slane %v460, 0
        %v534 = vrot.slane %v532, 4
        %v536 = vmul.f32 %v529, %v532
        %v537 = vmul.f32 %v530, %v534
        %v539 = vperm.slane %v461, 0
        %v541 = vrot.slane %v539, 4
        %v543 = vadd.f32 %v536, %v539
        %v544 = vadd.f32 %v537, %v541
        %547 = vst [vmem:[#allocation1] ss:$2 sm:$0xff] %v543
        %s548 = scalar_lea.vmem [#allocation1], 1
        %549 = vst [vmem:[%s548] ss:$2 sm:$0xff] %v544
        %v550 = vld.sshfl [vmem:[#allocation1] sm:$0xff pattern:$0x75316420]
        %v552 = vpack.c.bf16 %v550, %v550
        %v553 = vld [vmem:[%s3] sm:$0xf]
        %v554 = vld [vmem:[%s3 + $0x4] sm:$0xf]
        %v555 = vld [vmem:[%s3 + $0x8] sm:$0xf]
        %v556 = vld [vmem:[%s3 + $0xc] sm:$0xf]
        %v557 = vld [vmem:[%s4] sm:$0x1]
        %v559 = vperm.slane %v557, 0
        %v565 = vunpack.c.l.b16 %v553
        %v566 = vunpack.c.l.b16 %v554
        %v567 = vunpack.c.l.b16 %v555
        %v568 = vunpack.c.l.b16 %v556
        %v569 = vpack.c.b16 %v566, %v565
        %v570 = vpack.c.b16 %v568, %v567
        %v574 = vsel %vm469, %v552, 0
        %576 = vmatpush.bf16.msra.mxu0 0
        %577 = vmatpush.bf16.msra.mxu0 0
        %578 = vmatpush.bf16.msra.mxu0 0
        %579 = vmatpush.bf16.msra.mxu0 0
        %580 = vmatpush.bf16.msra.mxu0 0
        %581 = vmatpush.bf16.msra.mxu0 0
        %582 = vmatpush.bf16.msra.mxu0 %v570
        %583 = vmatpush.bf16.msra.mxu0 %v569
        %584 = vmatmul.bf16.gmra.mxu0 %v574
        %v585 = vpop.f32.mrf.mxu0
        %v586 = vadd.f32 %v559, %v585
        %v587 = vpop.f32.mrf.mxu0
        %588 = vdwg.mxu0
        %v590 = vrot.slane %v586, 4
        %v592 = vpack.c.bf16 %v586, %v586
        %v593 = vpack.c.bf16 %v590, %v590
        %v595 = vunpack.c.l.b16 %v592
        %v596 = vpack.c.b16 %v595, %v595
        %597 = vrot.lane.b32.xlu0 %v596, 96
        %v598 = vpop.permute.xlu0 %597
        %vm599 = vcmask 64512
        %v601 = vsel %vm599, %v592, 0
        %v604 = vsel %vm599, %v598, 0
        %606 = vmatpush.bf16.xpose.msra.mxu0 0
        %607 = vmatpush.bf16.xpose.msra.mxu0 0
        %608 = vmatpush.bf16.xpose.msra.mxu0 0
        %609 = vmatpush.bf16.xpose.msra.mxu0 0
        %610 = vmatpush.bf16.xpose.msra.mxu0 0
        %611 = vmatpush.bf16.xpose.msra.mxu0 0
        %612 = vmatpush.bf16.xpose.msra.mxu0 0
        %613 = vmatpush.bf16.xpose.msra.mxu0 %v604
        %614 = vmatmul.bf16.gmra.mxu0 %v601
        %v615 = vpop.f32.mrf.mxu0
        %v616 = vadd.f32 0.0, %v615
        %v617 = vpop.f32.mrf.mxu0
        %618 = vdwg.mxu0
        %v620 = vunpack.c.l.b16 %v593
        %v621 = vpack.c.b16 %v620, %v620
        %622 = vrot.lane.b32.xlu0 %v621, 96
        %v623 = vpop.permute.xlu0 %622
        %v625 = vsel %vm599, %v593, 0
        %v628 = vsel %vm599, %v623, 0
        %630 = vmatpush.bf16.xpose.msra.mxu0 0
        %631 = vmatpush.bf16.xpose.msra.mxu0 0
        %632 = vmatpush.bf16.xpose.msra.mxu0 0
        %633 = vmatpush.bf16.xpose.msra.mxu0 0
        %634 = vmatpush.bf16.xpose.msra.mxu0 0
        %635 = vmatpush.bf16.xpose.msra.mxu0 0
        %636 = vmatpush.bf16.xpose.msra.mxu0 0
        %637 = vmatpush.bf16.xpose.msra.mxu0 %v628
        %638 = vmatmul.bf16.gmra.mxu0 %v625
        %v639 = vpop.f32.mrf.mxu0
        %v640 = vadd.f32 0.0, %v639
        %v641 = vpop.f32.mrf.mxu0
        %642 = vdwg.mxu0
        %vm643 = vcmask 27648
        %v644 = vsel %vm643, %v616, -inf
        %645 = vmax.xlane.f32.xlu0 %v644
        %v646 = vpop.xlane.xlu0 %645
        %v647 = vsel %vm643, %v640, -inf
        %648 = vmax.xlane.f32.xlu0 %v647
        %v649 = vpop.xlane.xlu0 %648
        %v650 = vsub.f32 %v616, %v646
        %v651 = vsub.f32 %v640, %v649
        %v652 = vmul.f32 %v650, 1.442695
        %v653 = vpow.pop %v652
        %v654 = vmul.f32 %v651, 1.442695
        %v655 = vpow.pop %v654
        %v656 = vsel %vm643, %v653, 0.0
        %657 = vadd.xlane.f32.xlu0 %v656
        %v658 = vpop.xlane.xlu0 %657
        %v659 = vsel %vm643, %v655, 0.0
        %660 = vadd.xlane.f32.xlu0 %v659
        %v661 = vpop.xlane.xlu0 %660
        %v662 = vrcp.pop %v658
        %v663 = vmul.f32 %v658, %v662
        %v664 = vsub.f32 1.0, %v663
        %v665 = vmul.f32 %v662, %v664
        %v666 = vadd.f32 %v662, %v665
        %vm667 = vweird.f32 %v658
        %vm668 = vweird.f32 %v662
        %vm669 = vmor %vm667, %vm668
        %v670 = vsel %vm669, %v662, %v666
        %v671 = vand.u32 2147483647, %v658
        %vm672 = vcmp.eq.f32.partialorder %v671, 8.507059e+37
        %v673 = vand.u32 %v658, 2147483648
        %v674 = vor.u32 1.1754944e-38, %v673
        %v675 = vsel %vm672, %v674, %v670
        %v676 = vrcp.pop %v661
        %v677 = vmul.f32 %v661, %v676
        %v678 = vsub.f32 1.0, %v677
        %v679 = vmul.f32 %v676, %v678
        %v680 = vadd.f32 %v676, %v679
        %vm681 = vweird.f32 %v661
        %vm682 = vweird.f32 %v676
        %vm683 = vmor %vm681, %vm682
        %v684 = vsel %vm683, %v676, %v680
        %v685 = vand.u32 2147483647, %v661
        %vm686 = vcmp.eq.f32.partialorder %v685, 8.507059e+37
        %v687 = vand.u32 %v661, 2147483648
        %v688 = vor.u32 1.1754944e-38, %v687
        %v689 = vsel %vm686, %v688, %v684
        %v690 = vmul.f32 %v653, %v675
        %v691 = vmul.f32 %v655, %v689
        %v692 = vpack.c.bf16 %v690, %v690
        %v693 = vpack.c.bf16 %v691, %v691
        %694 = vrot.lane.b32.xlu0 %v596, 64
        %v695 = vpop.permute.xlu0 %694
        %vm696 = vcmask 31744
        %v698 = vsel %vm696, %v692, 0
        %vm700 = vcmask 1041408
        %v702 = vsel %vm700, %v695, 0
        %704 = vmatpush.bf16.msra.mxu0 0
        %705 = vmatpush.bf16.msra.mxu0 0
        %706 = vmatpush.bf16.msra.mxu0 0
        %707 = vmatpush.bf16.msra.mxu0 0
        %708 = vmatpush.bf16.msra.mxu0 0
        %709 = vmatpush.bf16.msra.mxu0 0
        %710 = vmatpush.bf16.msra.mxu0 0
        %711 = vmatpush.bf16.msra.mxu0 %v702
        %712 = vmatmul.bf16.gmra.mxu0 %v698
        %v713 = vpop.f32.mrf.mxu0
        %v714 = vadd.f32 0.0, %v713
        %v715 = vpop.f32.mrf.mxu0
        %716 = vdwg.mxu0
        %717 = vrot.lane.b32.xlu0 %v621, 64
        %v718 = vpop.permute.xlu0 %717
        %v720 = vsel %vm696, %v693, 0
        %v723 = vsel %vm700, %v718, 0
        %725 = vmatpush.bf16.msra.mxu0 0
        %726 = vmatpush.bf16.msra.mxu0 0
        %727 = vmatpush.bf16.msra.mxu0 0
        %728 = vmatpush.bf16.msra.mxu0 0
        %729 = vmatpush.bf16.msra.mxu0 0
        %730 = vmatpush.bf16.msra.mxu0 0
        %731 = vmatpush.bf16.msra.mxu0 0
        %732 = vmatpush.bf16.msra.mxu0 %v723
        %733 = vmatmul.bf16.gmra.mxu0 %v720
        %v734 = vpop.f32.mrf.mxu0
        %v735 = vadd.f32 0.0, %v734
        %v736 = vpop.f32.mrf.mxu0
        %737 = vdwg.mxu0
        %v738 = vpack.c.bf16 %v714, %v714
        %v739 = vpack.c.bf16 %v735, %v735
        %vm740 = vcmask 58368
        %741 = vst.msk [vmem:[#allocation2] sm:$0x3] %vm740, %v738
        %742 = vst.msk [vmem:[#allocation2 + $0x8] sm:$0x3] %vm740, %v739
        %743 = vrot.lane.b32.xlu0 %v596, 120
        %v744 = vpop.permute.xlu0 %743
        %745 = vrot.lane.b32.xlu0 %v596, 88
        %v746 = vpop.permute.xlu0 %745
        %v748 = vsel %vm599, %v744, 0
        %v751 = vsel %vm599, %v746, 0
        %753 = vmatpush.bf16.xpose.msra.mxu0 0
        %754 = vmatpush.bf16.xpose.msra.mxu0 0
        %755 = vmatpush.bf16.xpose.msra.mxu0 0
        %756 = vmatpush.bf16.xpose.msra.mxu0 0
        %757 = vmatpush.bf16.xpose.msra.mxu0 0
        %758 = vmatpush.bf16.xpose.msra.mxu0 0
        %759 = vmatpush.bf16.xpose.msra.mxu0 0
        %760 = vmatpush.bf16.xpose.msra.mxu0 %v751
        %761 = vmatmul.bf16.gmra.mxu0 %v748
        %v762 = vpop.f32.mrf.mxu0
        %v763 = vadd.f32 0.0, %v762
        %v764 = vpop.f32.mrf.mxu0
        %765 = vdwg.mxu0
        %766 = vrot.lane.b32.xlu0 %v621, 120
        %v767 = vpop.permute.xlu0 %766
        %768 = vrot.lane.b32.xlu0 %v621, 88
        %v769 = vpop.permute.xlu0 %768
        %v771 = vsel %vm599, %v767, 0
        %v774 = vsel %vm599, %v769, 0
        %776 = vmatpush.bf16.xpose.msra.mxu0 0
        %777 = vmatpush.bf16.xpose.msra.mxu0 0
        %778 = vmatpush.bf16.xpose.msra.mxu0 0
        %779 = vmatpush.bf16.xpose.msra.mxu0 0
        %780 = vmatpush.bf16.xpose.msra.mxu0 0
        %781 = vmatpush.bf16.xpose.msra.mxu0 0
        %782 = vmatpush.bf16.xpose.msra.mxu0 0
        %783 = vmatpush.bf16.xpose.msra.mxu0 %v774
        %784 = vmatmul.bf16.gmra.mxu0 %v771
        %v785 = vpop.f32.mrf.mxu0
        %v786 = vadd.f32 0.0, %v785
        %v787 = vpop.f32.mrf.mxu0
        %788 = vdwg.mxu0
        %v789 = vsel %vm643, %v763, -inf
        %790 = vmax.xlane.f32.xlu0 %v789
        %v791 = vpop.xlane.xlu0 %790
        %v792 = vsel %vm643, %v786, -inf
        %793 = vmax.xlane.f32.xlu0 %v792
        %v794 = vpop.xlane.xlu0 %793
        %v795 = vsub.f32 %v763, %v791
        %v796 = vsub.f32 %v786, %v794
        %v797 = vmul.f32 %v795, 1.442695
        %v798 = vpow.pop %v797
        %v799 = vmul.f32 %v796, 1.442695
        %v800 = vpow.pop %v799
        %v801 = vsel %vm643, %v798, 0.0
        %802 = vadd.xlane.f32.xlu0 %v801
        %v803 = vpop.xlane.xlu0 %802
        %v804 = vsel %vm643, %v800, 0.0
        %805 = vadd.xlane.f32.xlu0 %v804
        %v806 = vpop.xlane.xlu0 %805
        %v807 = vrcp.pop %v803
        %v808 = vmul.f32 %v803, %v807
        %v809 = vsub.f32 1.0, %v808
        %v810 = vmul.f32 %v807, %v809
        %v811 = vadd.f32 %v807, %v810
        %vm812 = vweird.f32 %v803
        %vm813 = vweird.f32 %v807
        %vm814 = vmor %vm812, %vm813
        %v815 = vsel %vm814, %v807, %v811
        %v816 = vand.u32 2147483647, %v803
        %vm817 = vcmp.eq.f32.partialorder %v816, 8.507059e+37
        %v818 = vand.u32 %v803, 2147483648
        %v819 = vor.u32 1.1754944e-38, %v818
        %v820 = vsel %vm817, %v819, %v815
        %v821 = vrcp.pop %v806
        %v822 = vmul.f32 %v806, %v821
        %v823 = vsub.f32 1.0, %v822
        %v824 = vmul.f32 %v821, %v823
        %v825 = vadd.f32 %v821, %v824
        %vm826 = vweird.f32 %v806
        %vm827 = vweird.f32 %v821
        %vm828 = vmor %vm826, %vm827
        %v829 = vsel %vm828, %v821, %v825
        %v830 = vand.u32 2147483647, %v806
        %vm831 = vcmp.eq.f32.partialorder %v830, 8.507059e+37
        %v832 = vand.u32 %v806, 2147483648
        %v833 = vor.u32 1.1754944e-38, %v832
        %v834 = vsel %vm831, %v833, %v829
        %v835 = vmul.f32 %v798, %v820
        %v836 = vmul.f32 %v800, %v834
        %v837 = vpack.c.bf16 %v835, %v835
        %v838 = vpack.c.bf16 %v836, %v836
        %839 = vrot.lane.b32.xlu0 %v596, 56
        %v840 = vpop.permute.xlu0 %839
        %v842 = vsel %vm696, %v837, 0
        %v845 = vsel %vm700, %v840, 0
        %847 = vmatpush.bf16.msra.mxu0 0
        %848 = vmatpush.bf16.msra.mxu0 0
        %849 = vmatpush.bf16.msra.mxu0 0
        %850 = vmatpush.bf16.msra.mxu0 0
        %851 = vmatpush.bf16.msra.mxu0 0
        %852 = vmatpush.bf16.msra.mxu0 0
        %853 = vmatpush.bf16.msra.mxu0 0
        %854 = vmatpush.bf16.msra.mxu0 %v845
        %855 = vmatmul.bf16.gmra.mxu0 %v842
        %v856 = vpop.f32.mrf.mxu0
        %v857 = vadd.f32 0.0, %v856
        %v858 = vpop.f32.mrf.mxu0
        %859 = vdwg.mxu0
        %860 = vrot.lane.b32.xlu0 %v621, 56
        %v861 = vpop.permute.xlu0 %860
        %v863 = vsel %vm696, %v838, 0
        %v866 = vsel %vm700, %v861, 0
        %868 = vmatpush.bf16.msra.mxu0 0
        %869 = vmatpush.bf16.msra.mxu0 0
        %870 = vmatpush.bf16.msra.mxu0 0
        %871 = vmatpush.bf16.msra.mxu0 0
        %872 = vmatpush.bf16.msra.mxu0 0
        %873 = vmatpush.bf16.msra.mxu0 0
        %874 = vmatpush.bf16.msra.mxu0 0
        %875 = vmatpush.bf16.msra.mxu0 %v866
        %876 = vmatmul.bf16.gmra.mxu0 %v863
        %v877 = vpop.f32.mrf.mxu0
        %v878 = vadd.f32 0.0, %v877
        %v879 = vpop.f32.mrf.mxu0
        %880 = vdwg.mxu0
        %v881 = vpack.c.bf16 %v857, %v857
        %v882 = vpack.c.bf16 %v878, %v878
        %s883 = scalar_lea.vmem [#allocation2], 2
        %884 = vst.msk [vmem:[%s883] sm:$0x3] %vm740, %v881
        %885 = vst.msk [vmem:[%s883 + $0x8] sm:$0x3] %vm740, %v882
        %886 = vrot.lane.b32.xlu0 %v596, 112
        %v887 = vpop.permute.xlu0 %886
        %888 = vrot.lane.b32.xlu0 %v596, 80
        %v889 = vpop.permute.xlu0 %888
        %v891 = vsel %vm599, %v887, 0
        %v894 = vsel %vm599, %v889, 0
        %896 = vmatpush.bf16.xpose.msra.mxu0 0
        %897 = vmatpush.bf16.xpose.msra.mxu0 0
        %898 = vmatpush.bf16.xpose.msra.mxu0 0
        %899 = vmatpush.bf16.xpose.msra.mxu0 0
        %900 = vmatpush.bf16.xpose.msra.mxu0 0
        %901 = vmatpush.bf16.xpose.msra.mxu0 0
        %902 = vmatpush.bf16.xpose.msra.mxu0 0
        %903 = vmatpush.bf16.xpose.msra.mxu0 %v894
        %904 = vmatmul.bf16.gmra.mxu0 %v891
        %v905 = vpop.f32.mrf.mxu0
        %v906 = vadd.f32 0.0, %v905
        %v907 = vpop.f32.mrf.mxu0
        %908 = vdwg.mxu0
        %909 = vrot.lane.b32.xlu0 %v621, 112
        %v910 = vpop.permute.xlu0 %909
        %911 = vrot.lane.b32.xlu0 %v621, 80
        %v912 = vpop.permute.xlu0 %911
        %v914 = vsel %vm599, %v910, 0
        %v917 = vsel %vm599, %v912, 0
        %919 = vmatpush.bf16.xpose.msra.mxu0 0
        %920 = vmatpush.bf16.xpose.msra.mxu0 0
        %921 = vmatpush.bf16.xpose.msra.mxu0 0
        %922 = vmatpush.bf16.xpose.msra.mxu0 0
        %923 = vmatpush.bf16.xpose.msra.mxu0 0
        %924 = vmatpush.bf16.xpose.msra.mxu0 0
        %925 = vmatpush.bf16.xpose.msra.mxu0 0
        %926 = vmatpush.bf16.xpose.msra.mxu0 %v917
        %927 = vmatmul.bf16.gmra.mxu0 %v914
        %v928 = vpop.f32.mrf.mxu0
        %v929 = vadd.f32 0.0, %v928
        %v930 = vpop.f32.mrf.mxu0
        %931 = vdwg.mxu0
        %v932 = vsel %vm643, %v906, -inf
        %933 = vmax.xlane.f32.xlu0 %v932
        %v934 = vpop.xlane.xlu0 %933
        %v935 = vsel %vm643, %v929, -inf
        %936 = vmax.xlane.f32.xlu0 %v935
        %v937 = vpop.xlane.xlu0 %936
        %v938 = vsub.f32 %v906, %v934
        %v939 = vsub.f32 %v929, %v937
        %v940 = vmul.f32 %v938, 1.442695
        %v941 = vpow.pop %v940
        %v942 = vmul.f32 %v939, 1.442695
        %v943 = vpow.pop %v942
        %v944 = vsel %vm643, %v941, 0.0
        %945 = vadd.xlane.f32.xlu0 %v944
        %v946 = vpop.xlane.xlu0 %945
        %v947 = vsel %vm643, %v943, 0.0
        %948 = vadd.xlane.f32.xlu0 %v947
        %v949 = vpop.xlane.xlu0 %948
        %v950 = vrcp.pop %v946
        %v951 = vmul.f32 %v946, %v950
        %v952 = vsub.f32 1.0, %v951
        %v953 = vmul.f32 %v950, %v952
        %v954 = vadd.f32 %v950, %v953
        %vm955 = vweird.f32 %v946
        %vm956 = vweird.f32 %v950
        %vm957 = vmor %vm955, %vm956
        %v958 = vsel %vm957, %v950, %v954
        %v959 = vand.u32 2147483647, %v946
        %vm960 = vcmp.eq.f32.partialorder %v959, 8.507059e+37
        %v961 = vand.u32 %v946, 2147483648
        %v962 = vor.u32 1.1754944e-38, %v961
        %v963 = vsel %vm960, %v962, %v958
        %v964 = vrcp.pop %v949
        %v965 = vmul.f32 %v949, %v964
        %v966 = vsub.f32 1.0, %v965
        %v967 = vmul.f32 %v964, %v966
        %v968 = vadd.f32 %v964, %v967
        %vm969 = vweird.f32 %v949
        %vm970 = vweird.f32 %v964
        %vm971 = vmor %vm969, %vm970
        %v972 = vsel %vm971, %v964, %v968
        %v973 = vand.u32 2147483647, %v949
        %vm974 = vcmp.eq.f32.partialorder %v973, 8.507059e+37
        %v975 = vand.u32 %v949, 2147483648
        %v976 = vor.u32 1.1754944e-38, %v975
        %v977 = vsel %vm974, %v976, %v972
        %v978 = vmul.f32 %v941, %v963
        %v979 = vmul.f32 %v943, %v977
        %v980 = vpack.c.bf16 %v978, %v978
        %v981 = vpack.c.bf16 %v979, %v979
        %982 = vrot.lane.b32.xlu0 %v596, 48
        %v983 = vpop.permute.xlu0 %982
        %v985 = vsel %vm696, %v980, 0
        %v988 = vsel %vm700, %v983, 0
        %990 = vmatpush.bf16.msra.mxu0 0
        %991 = vmatpush.bf16.msra.mxu0 0
        %992 = vmatpush.bf16.msra.mxu0 0
        %993 = vmatpush.bf16.msra.mxu0 0
        %994 = vmatpush.bf16.msra.mxu0 0
        %995 = vmatpush.bf16.msra.mxu0 0
        %996 = vmatpush.bf16.msra.mxu0 0
        %997 = vmatpush.bf16.msra.mxu0 %v988
        %998 = vmatmul.bf16.gmra.mxu0 %v985
        %v999 = vpop.f32.mrf.mxu0
        %v1000 = vadd.f32 0.0, %v999
        %v1001 = vpop.f32.mrf.mxu0
        %1002 = vdwg.mxu0
        %1003 = vrot.lane.b32.xlu0 %v621, 48
        %v1004 = vpop.permute.xlu0 %1003
        %v1006 = vsel %vm696, %v981, 0
        %v1009 = vsel %vm700, %v1004, 0
        %1011 = vmatpush.bf16.msra.mxu0 0
        %1012 = vmatpush.bf16.msra.mxu0 0
        %1013 = vmatpush.bf16.msra.mxu0 0
        %1014 = vmatpush.bf16.msra.mxu0 0
        %1015 = vmatpush.bf16.msra.mxu0 0
        %1016 = vmatpush.bf16.msra.mxu0 0
        %1017 = vmatpush.bf16.msra.mxu0 0
        %1018 = vmatpush.bf16.msra.mxu0 %v1009
        %1019 = vmatmul.bf16.gmra.mxu0 %v1006
        %v1020 = vpop.f32.mrf.mxu0
        %v1021 = vadd.f32 0.0, %v1020
        %v1022 = vpop.f32.mrf.mxu0
        %1023 = vdwg.mxu0
        %v1024 = vpack.c.bf16 %v1000, %v1000
        %v1025 = vpack.c.bf16 %v1021, %v1021
        %s1026 = scalar_lea.vmem [#allocation2], 4
        %1027 = vst.msk [vmem:[%s1026] sm:$0x3] %vm740, %v1024
        %1028 = vst.msk [vmem:[%s1026 + $0x8] sm:$0x3] %vm740, %v1025
        %1029 = vrot.lane.b32.xlu0 %v596, 104
        %v1030 = vpop.permute.xlu0 %1029
        %1031 = vrot.lane.b32.xlu0 %v596, 72
        %v1032 = vpop.permute.xlu0 %1031
        %v1034 = vsel %vm599, %v1030, 0
        %v1037 = vsel %vm599, %v1032, 0
        %1039 = vmatpush.bf16.xpose.msra.mxu0 0
        %1040 = vmatpush.bf16.xpose.msra.mxu0 0
        %1041 = vmatpush.bf16.xpose.msra.mxu0 0
        %1042 = vmatpush.bf16.xpose.msra.mxu0 0
        %1043 = vmatpush.bf16.xpose.msra.mxu0 0
        %1044 = vmatpush.bf16.xpose.msra.mxu0 0
        %1045 = vmatpush.bf16.xpose.msra.mxu0 0
        %1046 = vmatpush.bf16.xpose.msra.mxu0 %v1037
        %1047 = vmatmul.bf16.gmra.mxu0 %v1034
        %v1048 = vpop.f32.mrf.mxu0
        %v1049 = vadd.f32 0.0, %v1048
        %v1050 = vpop.f32.mrf.mxu0
        %1051 = vdwg.mxu0
        %1052 = vrot.lane.b32.xlu0 %v621, 104
        %v1053 = vpop.permute.xlu0 %1052
        %1054 = vrot.lane.b32.xlu0 %v621, 72
        %v1055 = vpop.permute.xlu0 %1054
        %v1057 = vsel %vm599, %v1053, 0
        %v1060 = vsel %vm599, %v1055, 0
        %1062 = vmatpush.bf16.xpose.msra.mxu0 0
        %1063 = vmatpush.bf16.xpose.msra.mxu0 0
        %1064 = vmatpush.bf16.xpose.msra.mxu0 0
        %1065 = vmatpush.bf16.xpose.msra.mxu0 0
        %1066 = vmatpush.bf16.xpose.msra.mxu0 0
        %1067 = vmatpush.bf16.xpose.msra.mxu0 0
        %1068 = vmatpush.bf16.xpose.msra.mxu0 0
        %1069 = vmatpush.bf16.xpose.msra.mxu0 %v1060
        %1070 = vmatmul.bf16.gmra.mxu0 %v1057
        %v1071 = vpop.f32.mrf.mxu0
        %v1072 = vadd.f32 0.0, %v1071
        %v1073 = vpop.f32.mrf.mxu0
        %1074 = vdwg.mxu0
        %v1075 = vsel %vm643, %v1049, -inf
        %1076 = vmax.xlane.f32.xlu0 %v1075
        %v1077 = vpop.xlane.xlu0 %1076
        %v1078 = vsel %vm643, %v1072, -inf
        %1079 = vmax.xlane.f32.xlu0 %v1078
        %v1080 = vpop.xlane.xlu0 %1079
        %v1081 = vsub.f32 %v1049, %v1077
        %v1082 = vsub.f32 %v1072, %v1080
        %v1083 = vmul.f32 %v1081, 1.442695
        %v1084 = vpow.pop %v1083
        %v1085 = vmul.f32 %v1082, 1.442695
        %v1086 = vpow.pop %v1085
        %v1087 = vsel %vm643, %v1084, 0.0
        %1088 = vadd.xlane.f32.xlu0 %v1087
        %v1089 = vpop.xlane.xlu0 %1088
        %v1090 = vsel %vm643, %v1086, 0.0
        %1091 = vadd.xlane.f32.xlu0 %v1090
        %v1092 = vpop.xlane.xlu0 %1091
        %v1093 = vrcp.pop %v1089
        %v1094 = vmul.f32 %v1089, %v1093
        %v1095 = vsub.f32 1.0, %v1094
        %v1096 = vmul.f32 %v1093, %v1095
        %v1097 = vadd.f32 %v1093, %v1096
        %vm1098 = vweird.f32 %v1089
        %vm1099 = vweird.f32 %v1093
        %vm1100 = vmor %vm1098, %vm1099
        %v1101 = vsel %vm1100, %v1093, %v1097
        %v1102 = vand.u32 2147483647, %v1089
        %vm1103 = vcmp.eq.f32.partialorder %v1102, 8.507059e+37
        %v1104 = vand.u32 %v1089, 2147483648
        %v1105 = vor.u32 1.1754944e-38, %v1104
        %v1106 = vsel %vm1103, %v1105, %v1101
        %v1107 = vrcp.pop %v1092
        %v1108 = vmul.f32 %v1092, %v1107
        %v1109 = vsub.f32 1.0, %v1108
        %v1110 = vmul.f32 %v1107, %v1109
        %v1111 = vadd.f32 %v1107, %v1110
        %vm1112 = vweird.f32 %v1092
        %vm1113 = vweird.f32 %v1107
        %vm1114 = vmor %vm1112, %vm1113
        %v1115 = vsel %vm1114, %v1107, %v1111
        %v1116 = vand.u32 2147483647, %v1092
        %vm1117 = vcmp.eq.f32.partialorder %v1116, 8.507059e+37
        %v1118 = vand.u32 %v1092, 2147483648
        %v1119 = vor.u32 1.1754944e-38, %v1118
        %v1120 = vsel %vm1117, %v1119, %v1115
        %v1121 = vmul.f32 %v1084, %v1106
        %v1122 = vmul.f32 %v1086, %v1120
        %v1123 = vpack.c.bf16 %v1121, %v1121
        %v1124 = vpack.c.bf16 %v1122, %v1122
        %1125 = vrot.lane.b32.xlu0 %v596, 40
        %v1126 = vpop.permute.xlu0 %1125
        %v1128 = vsel %vm696, %v1123, 0
        %v1131 = vsel %vm700, %v1126, 0
        %1133 = vmatpush.bf16.msra.mxu0 0
        %1134 = vmatpush.bf16.msra.mxu0 0
        %1135 = vmatpush.bf16.msra.mxu0 0
        %1136 = vmatpush.bf16.msra.mxu0 0
        %1137 = vmatpush.bf16.msra.mxu0 0
        %1138 = vmatpush.bf16.msra.mxu0 0
        %1139 = vmatpush.bf16.msra.mxu0 0
        %1140 = vmatpush.bf16.msra.mxu0 %v1131
        %1141 = vmatmul.bf16.gmra.mxu0 %v1128
        %v1142 = vpop.f32.mrf.mxu0
        %v1143 = vadd.f32 0.0, %v1142
        %v1144 = vpop.f32.mrf.mxu0
        %1145 = vdwg.mxu0
        %1146 = vrot.lane.b32.xlu0 %v621, 40
        %v1147 = vpop.permute.xlu0 %1146
        %v1149 = vsel %vm696, %v1124, 0
        %v1152 = vsel %vm700, %v1147, 0
        %1154 = vmatpush.bf16.msra.mxu0 0
        %1155 = vmatpush.bf16.msra.mxu0 0
        %1156 = vmatpush.bf16.msra.mxu0 0
        %1157 = vmatpush.bf16.msra.mxu0 0
        %1158 = vmatpush.bf16.msra.mxu0 0
        %1159 = vmatpush.bf16.msra.mxu0 0
        %1160 = vmatpush.bf16.msra.mxu0 0
        %1161 = vmatpush.bf16.msra.mxu0 %v1152
        %1162 = vmatmul.bf16.gmra.mxu0 %v1149
        %v1163 = vpop.f32.mrf.mxu0
        %v1164 = vadd.f32 0.0, %v1163
        %v1165 = vpop.f32.mrf.mxu0
        %1166 = vdwg.mxu0
        %v1167 = vpack.c.bf16 %v1143, %v1143
        %v1168 = vpack.c.bf16 %v1164, %v1164
        %s1169 = scalar_lea.vmem [#allocation2], 6
        %1170 = vst.msk [vmem:[%s1169] sm:$0x3] %vm740, %v1167
        %1171 = vst.msk [vmem:[%s1169 + $0x8] sm:$0x3] %vm740, %v1168
        %v1172 = vld [vmem:[#allocation2] sm:$0x3]
        %v1173 = vld [vmem:[#allocation2 + $0x2] sm:$0x3]
        %v1174 = vld [vmem:[#allocation2 + $0x4] sm:$0x3]
        %v1175 = vld [vmem:[#allocation2 + $0x6] sm:$0x3]
        %v1176 = vld [vmem:[#allocation2 + $0x8] sm:$0x3]
        %v1177 = vld [vmem:[#allocation2 + $0xa] sm:$0x3]
        %v1178 = vld [vmem:[#allocation2 + $0xc] sm:$0x3]
        %v1179 = vld [vmem:[#allocation2 + $0xe] sm:$0x3]
        %1181 = vst [vmem:[#allocation1] ss:$2 sm:$0xff] %v1172
        %v1182 = vld.sshfl [vmem:[#allocation1] sm:$0xff pattern:$0x75643120]
        %s1185 = scalar_lea.vmem [#allocation1], 16
        %1186 = vst [vmem:[%s1185] ss:$2 sm:$0xff] %v1173
        %v1187 = vld.sshfl [vmem:[#allocation1 + $0x10] sm:$0xff pattern:$0x75643120]
        %s1190 = scalar_lea.vmem [#allocation1], 32
        %1191 = vst [vmem:[%s1190] ss:$2 sm:$0xff] %v1174
        %v1192 = vld.sshfl [vmem:[#allocation1 + $0x20] sm:$0xff pattern:$0x75643120]
        %s1195 = scalar_lea.vmem [#allocation1], 48
        %1196 = vst [vmem:[%s1195] ss:$2 sm:$0xff] %v1175
        %v1197 = vld.sshfl [vmem:[#allocation1 + $0x30] sm:$0xff pattern:$0x75643120]
        %1200 = vst [vmem:[#allocation1] ss:$2 sm:$0xff] %v1176
        %v1201 = vld.sshfl [vmem:[#allocation1] sm:$0xff pattern:$0x75643120]
        %1204 = vst [vmem:[%s1185] ss:$2 sm:$0xff] %v1177
        %v1205 = vld.sshfl [vmem:[#allocation1 + $0x10] sm:$0xff pattern:$0x75643120]
        %1208 = vst [vmem:[%s1190] ss:$2 sm:$0xff] %v1178
        %v1209 = vld.sshfl [vmem:[#allocation1 + $0x20] sm:$0xff pattern:$0x75643120]
        %1212 = vst [vmem:[%s1195] ss:$2 sm:$0xff] %v1179
        %v1213 = vld.sshfl [vmem:[#allocation1 + $0x30] sm:$0xff pattern:$0x75643120]
        %v1215 = vunpack.c.l.b16 %v1182
        %v1216 = vunpack.c.l.b16 %v1187
        %v1217 = vunpack.c.l.b16 %v1192
        %v1218 = vunpack.c.l.b16 %v1197
        %v1219 = vunpack.c.l.b16 %v1201
        %v1220 = vunpack.c.l.b16 %v1205
        %v1221 = vunpack.c.l.b16 %v1209
        %v1222 = vunpack.c.l.b16 %v1213
        %v1223 = vrot.slane %v1216, 7
        %vm1224 = vcmask 1041409
        %v1225 = vsel %vm1224, %v1223, %v1215
        %v1226 = vrot.slane %v1217, 6
        %vm1227 = vcmask 1042434
        %v1228 = vsel %vm1227, %v1226, %v1225
        %v1229 = vrot.slane %v1218, 5
        %vm1230 = vcmask 1043459
        %v1231 = vsel %vm1230, %v1229, %v1228
        %v1232 = vrot.slane %v1219, 4
        %vm1233 = vcmask 1044484
        %v1234 = vsel %vm1233, %v1232, %v1231
        %v1235 = vrot.slane %v1220, 3
        %vm1236 = vcmask 1045509
        %v1237 = vsel %vm1236, %v1235, %v1234
        %v1238 = vrot.slane %v1221, 2
        %vm1239 = vcmask 1046534
        %v1240 = vsel %vm1239, %v1238, %v1237
        %v1241 = vrot.slane %v1222, 1
        %vm1242 = vcmask 1047559
        %v1243 = vsel %vm1242, %v1241, %v1240
        %v1244 = vpack.c.b16 %v1243, %v1243
        %vm1246 = vcmask 60416
        %1247 = vst.msk [vmem:[#allocation3] sm:$0xf] %vm1246, %v1244
        %1248 = vst [vmem:[#allocation1] ss:$2 sm:$0xff] %v1172
        %v1249 = vld.sshfl [vmem:[#allocation1] sm:$0xff pattern:$0x75643120]
        %s1251 = scalar_lea.vmem [#allocation1], 16
        %1252 = vst [vmem:[%s1251] ss:$2 sm:$0xff] %v1173
        %v1253 = vld.sshfl [vmem:[#allocation1 + $0x10] sm:$0xff pattern:$0x75643120]
        %s1255 = scalar_lea.vmem [#allocation1], 32
        %1256 = vst [vmem:[%s1255] ss:$2 sm:$0xff] %v1174
        %v1257 = vld.sshfl [vmem:[#allocation1 + $0x20] sm:$0xff pattern:$0x75643120]
        %s1259 = scalar_lea.vmem [#allocation1], 48
        %1260 = vst [vmem:[%s1259] ss:$2 sm:$0xff] %v1175
        %v1261 = vld.sshfl [vmem:[#allocation1 + $0x30] sm:$0xff pattern:$0x75643120]
        %1263 = vst [vmem:[#allocation1] ss:$2 sm:$0xff] %v1176
        %v1264 = vld.sshfl [vmem:[#allocation1] sm:$0xff pattern:$0x75643120]
        %1266 = vst [vmem:[%s1251] ss:$2 sm:$0xff] %v1177
        %v1267 = vld.sshfl [vmem:[#allocation1 + $0x10] sm:$0xff pattern:$0x75643120]
        %1269 = vst [vmem:[%s1255] ss:$2 sm:$0xff] %v1178
        %v1270 = vld.sshfl [vmem:[#allocation1 + $0x20] sm:$0xff pattern:$0x75643120]
        %1272 = vst [vmem:[%s1259] ss:$2 sm:$0xff] %v1179
        %v1273 = vld.sshfl [vmem:[#allocation1 + $0x30] sm:$0xff pattern:$0x75643120]
        %v1275 = vunpack.c.l.b16 %v1249
        %v1276 = vunpack.c.l.b16 %v1253
        %v1277 = vunpack.c.l.b16 %v1257
        %v1278 = vunpack.c.l.b16 %v1261
        %v1279 = vunpack.c.l.b16 %v1264
        %v1280 = vunpack.c.l.b16 %v1267
        %v1281 = vunpack.c.l.b16 %v1270
        %v1282 = vunpack.c.l.b16 %v1273
        %v1283 = vrot.slane %v1275, 1
        %v1284 = vsel %vm1224, %v1276, %v1283
        %v1285 = vrot.slane %v1277, 7
        %v1286 = vsel %vm1227, %v1285, %v1284
        %v1287 = vrot.slane %v1278, 6
        %v1288 = vsel %vm1230, %v1287, %v1286
        %v1289 = vrot.slane %v1279, 5
        %v1290 = vsel %vm1233, %v1289, %v1288
        %v1291 = vrot.slane %v1280, 4
        %v1292 = vsel %vm1236, %v1291, %v1290
        %v1293 = vrot.slane %v1281, 3
        %v1294 = vsel %vm1239, %v1293, %v1292
        %v1295 = vrot.slane %v1282, 2
        %v1296 = vsel %vm1242, %v1295, %v1294
        %v1297 = vpack.c.b16 %v1296, %v1296
        %1298 = vrot.lane.b32.xlu0 %v1297, 8
        %v1299 = vpop.permute.xlu0 %1298
        %vm1301 = vcmask 126016
        %1302 = vst.msk [vmem:[#allocation3] sm:$0xf] %vm1301, %v1299
        %1303 = vst [vmem:[#allocation1] ss:$2 sm:$0xff] %v1172
        %v1304 = vld.sshfl [vmem:[#allocation1] sm:$0xff pattern:$0x75643120]
        %s1306 = scalar_lea.vmem [#allocation1], 16
        %1307 = vst [vmem:[%s1306] ss:$2 sm:$0xff] %v1173
        %v1308 = vld.sshfl [vmem:[#allocation1 + $0x10] sm:$0xff pattern:$0x75643120]
        %s1310 = scalar_lea.vmem [#allocation1], 32
        %1311 = vst [vmem:[%s1310] ss:$2 sm:$0xff] %v1174
        %v1312 = vld.sshfl [vmem:[#allocation1 + $0x20] sm:$0xff pattern:$0x75643120]
        %s1314 = scalar_lea.vmem [#allocation1], 48
        %1315 = vst [vmem:[%s1314] ss:$2 sm:$0xff] %v1175
        %v1316 = vld.sshfl [vmem:[#allocation1 + $0x30] sm:$0xff pattern:$0x75643120]
        %1318 = vst [vmem:[#allocation1] ss:$2 sm:$0xff] %v1176
        %v1319 = vld.sshfl [vmem:[#allocation1] sm:$0xff pattern:$0x75643120]
        %1321 = vst [vmem:[%s1306] ss:$2 sm:$0xff] %v1177
        %v1322 = vld.sshfl [vmem:[#allocation1 + $0x10] sm:$0xff pattern:$0x75643120]
        %1324 = vst [vmem:[%s1310] ss:$2 sm:$0xff] %v1178
        %v1325 = vld.sshfl [vmem:[#allocation1 + $0x20] sm:$0xff pattern:$0x75643120]
        %1327 = vst [vmem:[%s1314] ss:$2 sm:$0xff] %v1179
        %v1328 = vld.sshfl [vmem:[#allocation1 + $0x30] sm:$0xff pattern:$0x75643120]
        %v1330 = vunpack.c.l.b16 %v1304
        %v1331 = vunpack.c.l.b16 %v1308
        %v1332 = vunpack.c.l.b16 %v1312
        %v1333 = vunpack.c.l.b16 %v1316
        %v1334 = vunpack.c.l.b16 %v1319
        %v1335 = vunpack.c.l.b16 %v1322
        %v1336 = vunpack.c.l.b16 %v1325
        %v1337 = vunpack.c.l.b16 %v1328
        %v1338 = vrot.slane %v1330, 2
        %v1339 = vrot.slane %v1331, 1
        %v1340 = vsel %vm1224, %v1339, %v1338
        %v1341 = vsel %vm1227, %v1332, %v1340
        %v1342 = vrot.slane %v1333, 7
        %v1343 = vsel %vm1230, %v1342, %v1341
        %v1344 = vrot.slane %v1334, 6
        %v1345 = vsel %vm1233, %v1344, %v1343
        %v1346 = vrot.slane %v1335, 5
        %v1347 = vsel %vm1236, %v1346, %v1345
        %v1348 = vrot.slane %v1336, 4
        %v1349 = vsel %vm1239, %v1348, %v1347
        %v1350 = vrot.slane %v1337, 3
        %v1351 = vsel %vm1242, %v1350, %v1349
        %v1352 = vpack.c.b16 %v1351, %v1351
        %1353 = vrot.lane.b32.xlu0 %v1352, 16
        %v1354 = vpop.permute.xlu0 %1353
        %vm1356 = vcmask 191616
        %1357 = vst.msk [vmem:[#allocation3] sm:$0xf] %vm1356, %v1354
        %1358 = vst [vmem:[#allocation1] ss:$2 sm:$0xff] %v1172
        %v1359 = vld.sshfl [vmem:[#allocation1] sm:$0xff pattern:$0x75643120]
        %s1361 = scalar_lea.vmem [#allocation1], 16
        %1362 = vst [vmem:[%s1361] ss:$2 sm:$0xff] %v1173
        %v1363 = vld.sshfl [vmem:[#allocation1 + $0x10] sm:$0xff pattern:$0x75643120]
        %s1365 = scalar_lea.vmem [#allocation1], 32
        %1366 = vst [vmem:[%s1365] ss:$2 sm:$0xff] %v1174
        %v1367 = vld.sshfl [vmem:[#allocation1 + $0x20] sm:$0xff pattern:$0x75643120]
        %s1369 = scalar_lea.vmem [#allocation1], 48
        %1370 = vst [vmem:[%s1369] ss:$2 sm:$0xff] %v1175
        %v1371 = vld.sshfl [vmem:[#allocation1 + $0x30] sm:$0xff pattern:$0x75643120]
        %1373 = vst [vmem:[#allocation1] ss:$2 sm:$0xff] %v1176
        %v1374 = vld.sshfl [vmem:[#allocation1] sm:$0xff pattern:$0x75643120]
        %1376 = vst [vmem:[%s1361] ss:$2 sm:$0xff] %v1177
        %v1377 = vld.sshfl [vmem:[#allocation1 + $0x10] sm:$0xff pattern:$0x75643120]
        %1379 = vst [vmem:[%s1365] ss:$2 sm:$0xff] %v1178
        %v1380 = vld.sshfl [vmem:[#allocation1 + $0x20] sm:$0xff pattern:$0x75643120]
        %1382 = vst [vmem:[%s1369] ss:$2 sm:$0xff] %v1179
        %v1383 = vld.sshfl [vmem:[#allocation1 + $0x30] sm:$0xff pattern:$0x75643120]
        %v1385 = vunpack.c.l.b16 %v1359
        %v1386 = vunpack.c.l.b16 %v1363
        %v1387 = vunpack.c.l.b16 %v1367
        %v1388 = vunpack.c.l.b16 %v1371
        %v1389 = vunpack.c.l.b16 %v1374
        %v1390 = vunpack.c.l.b16 %v1377
        %v1391 = vunpack.c.l.b16 %v1380
        %v1392 = vunpack.c.l.b16 %v1383
        %v1393 = vrot.slane %v1385, 3
        %v1394 = vrot.slane %v1386, 2
        %v1395 = vsel %vm1224, %v1394, %v1393
        %v1396 = vrot.slane %v1387, 1
        %v1397 = vsel %vm1227, %v1396, %v1395
        %v1398 = vsel %vm1230, %v1388, %v1397
        %v1399 = vrot.slane %v1389, 7
        %v1400 = vsel %vm1233, %v1399, %v1398
        %v1401 = vrot.slane %v1390, 6
        %v1402 = vsel %vm1236, %v1401, %v1400
        %v1403 = vrot.slane %v1391, 5
        %v1404 = vsel %vm1239, %v1403, %v1402
        %v1405 = vrot.slane %v1392, 4
        %v1406 = vsel %vm1242, %v1405, %v1404
        %v1407 = vpack.c.b16 %v1406, %v1406
        %1408 = vrot.lane.b32.xlu0 %v1407, 24
        %v1409 = vpop.permute.xlu0 %1408
        %vm1411 = vcmask 257216
        %1412 = vst.msk [vmem:[#allocation3] sm:$0xf] %vm1411, %v1409
        %v1413 = vld [vmem:[#allocation3] sm:$0xf]
        %v1414 = vld [vmem:[%s5] sm:$0xf]
        %v1415 = vld [vmem:[%s5 + $0x4] sm:$0xf]
        %v1416 = vld [vmem:[%s5 + $0x8] sm:$0xf]
        %v1417 = vld [vmem:[%s5 + $0xc] sm:$0xf]
        %v1418 = vld [vmem:[%s6] sm:$0x1]
        %v1420 = vperm.slane %v1418, 0
        %v1426 = vunpack.c.l.b16 %v1414
        %v1427 = vunpack.c.l.b16 %v1415
        %v1428 = vunpack.c.l.b16 %v1416
        %v1429 = vunpack.c.l.b16 %v1417
        %v1430 = vpack.c.b16 %v1427, %v1426
        %v1431 = vpack.c.b16 %v1429, %v1428
        %v1435 = vsel %vm469, %v1413, 0
        %1437 = vmatpush.bf16.msra.mxu0 0
        %1438 = vmatpush.bf16.msra.mxu0 0
        %1439 = vmatpush.bf16.msra.mxu0 0
        %1440 = vmatpush.bf16.msra.mxu0 0
        %1441 = vmatpush.bf16.msra.mxu0 0
        %1442 = vmatpush.bf16.msra.mxu0 0
        %1443 = vmatpush.bf16.msra.mxu0 %v1431
        %1444 = vmatpush.bf16.msra.mxu0 %v1430
        %1445 = vmatmul.bf16.gmra.mxu0 %v1435
        %v1446 = vpop.f32.mrf.mxu0
        %v1447 = vadd.f32 %v1420, %v1446
        %v1448 = vpop.f32.mrf.mxu0
        %1449 = vdwg.mxu0
        %v1451 = vrot.slane %v1447, 4
        %v1453 = vadd.f32 %v458, %v1447
        %v1454 = vadd.f32 %v459, %v1451
        %v1455 = vld [vmem:[%s7] sm:$0x1]
        %v1456 = vld [vmem:[%s8] sm:$0x1]
        %1459 = vst [vmem:[#allocation1] ss:$2 sm:$0xff] %v1453
        %s1460 = scalar_lea.vmem [#allocation1], 1
        %1461 = vst [vmem:[%s1460] ss:$2 sm:$0xff] %v1454
        %v1462 = vld.sshfl [vmem:[#allocation1] sm:$0xff pattern:$0x75316420]
        %v1464 = vsel %vm469, %v1462, 0.0
        %1465 = vadd.xlane.f32.xlu0 %v1464
        %v1466 = vpop.xlane.xlu0 %1465
        %v1467 = vmul.f32 %v1466, %v479
        %v1470 = vunpack.c.l.s4 839922192
        %v1471 = vunpack.c.0.s8 %v1470
        %v1472 = vperm.slane %v1467, %v1471
        %v1474 = vunpack.c.l.s4 1985246804
        %v1475 = vunpack.c.0.s8 %v1474
        %v1476 = vperm.slane %v1467, %v1475
        %v1479 = vsub.f32 %v1453, %v1472
        %v1480 = vsub.f32 %v1454, %v1476
        %v1481 = vmul.f32 %v1479, %v1479
        %v1482 = vmul.f32 %v1480, %v1480
        %1485 = vst [vmem:[#allocation1] ss:$2 sm:$0xff] %v1481
        %s1486 = scalar_lea.vmem [#allocation1], 1
        %1487 = vst [vmem:[%s1486] ss:$2 sm:$0xff] %v1482
        %v1488 = vld.sshfl [vmem:[#allocation1] sm:$0xff pattern:$0x75316420]
        %v1490 = vsel %vm469, %v1488, 0.0
        %1491 = vadd.xlane.f32.xlu0 %v1490
        %v1492 = vpop.xlane.xlu0 %1491
        %v1493 = vmul.f32 %v1492, %v479
        %v1494 = vadd.f32 %v1493, 1e-06
        %v1495 = vrsqrt.pop %v1494
        %v1496 = vmul.f32 %v1495, %v1494
        %v1497 = vmul.f32 %v1496, %v1495
        %v1498 = vmul.f32 0.5, %v1497
        %v1499 = vsub.f32 1.5, %v1498
        %v1500 = vmul.f32 %v1495, %v1499
        %vm1501 = vweird.f32 %v1494
        %vm1502 = vweird.f32 %v1495
        %vm1503 = vmor %vm1501, %vm1502
        %v1504 = vsel %vm1503, %v1495, %v1500
        %v1507 = vunpack.c.l.s4 839922192
        %v1508 = vunpack.c.0.s8 %v1507
        %v1509 = vperm.slane %v1504, %v1508
        %v1511 = vunpack.c.l.s4 1985246804
        %v1512 = vunpack.c.0.s8 %v1511
        %v1513 = vperm.slane %v1504, %v1512
        %v1516 = vmul.f32 %v1479, %v1509
        %v1517 = vmul.f32 %v1480, %v1513
        %v1519 = vperm.slane %v1455, 0
        %v1521 = vrot.slane %v1519, 4
        %v1523 = vmul.f32 %v1516, %v1519
        %v1524 = vmul.f32 %v1517, %v1521
        %v1526 = vperm.slane %v1456, 0
        %v1528 = vrot.slane %v1526, 4
        %v1530 = vadd.f32 %v1523, %v1526
        %v1531 = vadd.f32 %v1524, %v1528
        %1534 = vst [vmem:[#allocation1] ss:$2 sm:$0xff] %v1530
        %s1535 = scalar_lea.vmem [#allocation1], 1
        %1536 = vst [vmem:[%s1535] ss:$2 sm:$0xff] %v1531
        %v1537 = vld.sshfl [vmem:[#allocation1] sm:$0xff pattern:$0x75316420]
        %v1539 = vpack.c.bf16 %v1537, %v1537
        %v1540 = vld [vmem:[%s9] sm:$0xf]
        %v1541 = vld [vmem:[%s9 + $0x4] sm:$0xf]
        %v1542 = vld [vmem:[%s9 + $0x8] sm:$0xf]
        %v1543 = vld [vmem:[%s9 + $0xc] sm:$0xf]
        %v1544 = vld [vmem:[%s10] sm:$0x1]
        %v1546 = vperm.slane %v1544, 0
        %v1552 = vunpack.c.l.b16 %v1540
        %v1553 = vunpack.c.l.b16 %v1541
        %v1554 = vunpack.c.l.b16 %v1542
        %v1555 = vunpack.c.l.b16 %v1543
        %v1556 = vpack.c.b16 %v1553, %v1552
        %v1557 = vpack.c.b16 %v1555, %v1554
        %v1561 = vsel %vm469, %v1539, 0
        %1563 = vmatpush.bf16.msra.mxu0 0
        %1564 = vmatpush.bf16.msra.mxu0 0
        %1565 = vmatpush.bf16.msra.mxu0 0
        %1566 = vmatpush.bf16.msra.mxu0 0
        %1567 = vmatpush.bf16.msra.mxu0 0
        %1568 = vmatpush.bf16.msra.mxu0 0
        %1569 = vmatpush.bf16.msra.mxu0 %v1557
        %1570 = vmatpush.bf16.msra.mxu0 %v1556
        %1571 = vmatmul.bf16.gmra.mxu0 %v1561
        %v1572 = vpop.f32.mrf.mxu0
        %v1573 = vadd.f32 %v1546, %v1572
        %v1574 = vpop.f32.mrf.mxu0
        %1575 = vdwg.mxu0
        %v1576 = vmul.f32 %v1573, 0.5
        %v1577 = vmul.f32 %v1573, 0.70710677
        %v1578 = vmul.f32 %v1577, %v1577
        %v1579 = vmin.f32 16.0, %v1578
        %v1580 = vmul.f32 %v1579, 2.1237322e-06
        %v1581 = vadd.f32 %v1580, 0.00028619796
        %v1582 = vmul.f32 %v1579, %v1581
        %v1583 = vadd.f32 %v1582, 0.0036580483
        %v1584 = vmul.f32 %v1579, %v1583
        %v1585 = vadd.f32 %v1584, 0.05243302
        %v1586 = vmul.f32 %v1579, %v1585
        %v1587 = vadd.f32 %v1586, 0.18741608
        %v1588 = vmul.f32 %v1579, %v1587
        %v1589 = vadd.f32 %v1588, 1.1283791
        %v1590 = vmul.f32 %v1577, %v1589
        %v1591 = vmul.f32 %v1579, 3.8918573e-05
        %v1592 = vadd.f32 %v1591, 0.001143296
        %v1593 = vmul.f32 %v1579, %v1592
        %v1594 = vadd.f32 %v1593, 0.014752088
        %v1595 = vmul.f32 %v1579, %v1594
        %v1596 = vadd.f32 %v1595, 0.112945676
        %v1597 = vmul.f32 %v1579, %v1596
        %v1598 = vadd.f32 %v1597, 0.4994258
        %v1599 = vmul.f32 %v1579, %v1598
        %v1600 = vadd.f32 %v1599, 1.0
        %v1601 = vrcp.pop %v1600
        %v1602 = vmul.f32 %v1600, %v1601
        %v1603 = vsub.f32 1.0, %v1602
        %v1604 = vmul.f32 %v1601, %v1603
        %v1605 = vadd.f32 %v1601, %v1604
        %vm1606 = vweird.f32 %v1600
        %vm1607 = vweird.f32 %v1601
        %vm1608 = vmor %vm1606, %vm1607
        %v1609 = vsel %vm1608, %v1601, %v1605
        %v1610 = vand.u32 2147483647, %v1600
        %vm1611 = vcmp.eq.f32.partialorder %v1610, 8.507059e+37
        %v1612 = vand.u32 %v1600, 2147483648
        %v1613 = vor.u32 1.1754944e-38, %v1612
        %v1614 = vsel %vm1611, %v1613, %v1609
        %v1615 = vmul.f32 %v1590, %v1614
        %v1616 = vmin.f32 %v1615, 1.0
        %v1617 = vmax.f32 %v1616, -1.0
        %v1618 = vadd.f32 %v1617, 1.0
        %v1619 = vmul.f32 %v1576, %v1618
        %v1620 = vpack.c.bf16 %v1619, %v1619
        %v1621 = vld [vmem:[%s11] sm:$0xf]
        %v1622 = vld [vmem:[%s11 + $0x4] sm:$0xf]
        %v1623 = vld [vmem:[%s11 + $0x8] sm:$0xf]
        %v1624 = vld [vmem:[%s11 + $0xc] sm:$0xf]
        %v1625 = vld [vmem:[%s11 + $0x10] sm:$0xf]
        %v1626 = vld [vmem:[%s11 + $0x14] sm:$0xf]
        %v1627 = vld [vmem:[%s11 + $0x18] sm:$0xf]
        %v1628 = vld [vmem:[%s11 + $0x1c] sm:$0xf]
        %v1629 = vld [vmem:[%s11 + $0x20] sm:$0xf]
        %v1630 = vld [vmem:[%s11 + $0x24] sm:$0xf]
        %v1631 = vld [vmem:[%s11 + $0x28] sm:$0xf]
        %v1632 = vld [vmem:[%s11 + $0x2c] sm:$0xf]
        %v1633 = vld [vmem:[%s11 + $0x30] sm:$0xf]
        %v1634 = vld [vmem:[%s11 + $0x34] sm:$0xf]
        %v1635 = vld [vmem:[%s11 + $0x38] sm:$0xf]
        %v1636 = vld [vmem:[%s11 + $0x3c] sm:$0xf]
        %v1637 = vld [vmem:[%s12] sm:$0x1]
        %v1639 = vperm.slane %v1637, 0
        %v1657 = vunpack.c.l.b16 %v1621
        %v1658 = vunpack.c.l.b16 %v1622
        %v1659 = vunpack.c.l.b16 %v1623
        %v1660 = vunpack.c.l.b16 %v1624
        %v1661 = vunpack.c.l.b16 %v1625
        %v1662 = vunpack.c.l.b16 %v1626
        %v1663 = vunpack.c.l.b16 %v1627
        %v1664 = vunpack.c.l.b16 %v1628
        %v1665 = vunpack.c.l.b16 %v1629
        %v1666 = vunpack.c.l.b16 %v1630
        %v1667 = vunpack.c.l.b16 %v1631
        %v1668 = vunpack.c.l.b16 %v1632
        %v1669 = vunpack.c.l.b16 %v1633
        %v1670 = vunpack.c.l.b16 %v1634
        %v1671 = vunpack.c.l.b16 %v1635
        %v1672 = vunpack.c.l.b16 %v1636
        %v1673 = vpack.c.b16 %v1658, %v1657
        %v1674 = vpack.c.b16 %v1660, %v1659
        %v1675 = vpack.c.b16 %v1662, %v1661
        %v1676 = vpack.c.b16 %v1664, %v1663
        %v1677 = vpack.c.b16 %v1666, %v1665
        %v1678 = vpack.c.b16 %v1668, %v1667
        %v1679 = vpack.c.b16 %v1670, %v1669
        %v1680 = vpack.c.b16 %v1672, %v1671
        %1689 = vmatpush.bf16.msra.mxu0 %v1680
        %1690 = vmatpush.bf16.msra.mxu0 %v1679
        %1691 = vmatpush.bf16.msra.mxu0 %v1678
        %1692 = vmatpush.bf16.msra.mxu0 %v1677
        %1693 = vmatpush.bf16.msra.mxu0 %v1676
        %1694 = vmatpush.bf16.msra.mxu0 %v1675
        %1695 = vmatpush.bf16.msra.mxu0 %v1674
        %1696 = vmatpush.bf16.msra.mxu0 %v1673
        %1697 = vmatmul.bf16.gmra.mxu0 %v1620
        %v1698 = vpop.f32.mrf.mxu0
        %v1699 = vadd.f32 %v1639, %v1698
        %v1700 = vpop.f32.mrf.mxu0
        %1701 = vdwg.mxu0
        %v1703 = vrot.slane %v1699, 4
        %v1705 = vadd.f32 %v1453, %v1699
        %v1706 = vadd.f32 %v1454, %v1703
        %vm1707 = vcmask 257024
        %1708 = vst.msk [vmem:[%s449] sm:$0xf] %vm1707, %v1705
        %1709 = vst.msk [vmem:[%s449 + $0x4] sm:$0xf] %vm1707, %v1706
        %s1710 = sand.u32 %s314, 1
        %s1711 = scalar_lea.sflag [#allocation6], %s1710
        %s1712 = sand.u32 %s314, 1
        %s1713 = smul.addr %s1712, 8
        %s1714 = scalar_lea.vmem [#allocation7], %s1713
        // Predicated region
        $region77: #{tpu_custom_call.1} parent=71 // pred_check
          %p1715 = pneg %p324
        $region78: #{tpu_custom_call.1} parent=71 // pred_check_branch
          %1717 = sbr.rel (%p1715) target = $region80
        $region79: #{tpu_custom_call.1} parent=71 // pred_region
          %s1718 = smul.u32 2, %s28
          %1720 = vsyncadd %s1711, 0
          %s1721 = smul.addr %s1718, 4
          %s1722 = scalar_lea.hbm %s13, %s1721
          %s1723 = sshll.u32 %s1714, 4
          %s1724 = int_to_ptr.vmem [resolvable:$true] %s1723
          %s1725 = sshll.u32 %s1722, 4
          %s1726 = int_to_ptr.hbm [resolvable:$true] %s1725
          %1731 = dma.vmem_to_hbm [thread:$0]  %s1724, 128, %s1726, %s1711, 64, 64, 4
        $region80: #{tpu_custom_call.1} parent=71 // pred_fallthru
          _
      $region72: #{tpu_custom_call.1} parent=5 // pred_fallthru
        _
      %p1732 = scmp.le.s32.totalorder 2, %s23
      // Predicated region
      $region81: #{tpu_custom_call.1} parent=5 // pred_check
        %p1733 = pneg %p1732
      $region82: #{tpu_custom_call.1} parent=5 // pred_check_branch
        %1735 = sbr.rel (%p1733) target = $region84
      $region83: #{tpu_custom_call.1} parent=5 // pred_region
        %s1736 = ssub.s32 %s23, 2
        // Predicated region
        $region85: #{tpu_custom_call.1} parent=83 // pred_check
          %p1737 = pneg %p330
        $region86: #{tpu_custom_call.1} parent=83 // pred_check_branch
          %1739 = sbr.rel (%p1737) target = $region88
        $region87: #{tpu_custom_call.1} parent=83 // pred_region
          %s1740 = sand.u32 %s315, 1
          %s1741 = scalar_lea.sflag [#allocation6], %s1740
          %s1742 = sand.u32 %s315, 1
          %s1743 = smul.addr %s1742, 8
          %s1744 = scalar_lea.vmem [#allocation7], %s1743
          %1746 = dma.done %s1741, 128
        $region88: #{tpu_custom_call.1} parent=83 // pred_fallthru
          _
      $region84: #{tpu_custom_call.1} parent=5 // pred_fallthru
        _
    $region6: #{tpu_custom_call.1} parent=1 // loop_footer
      %s27 = sadd.s32 1, %s23
    $region7: #{tpu_custom_call.1} parent=1 // loop_footer_branch
      %22 = sbr.rel target = $region3
    $region8: #{tpu_custom_call.1} parent=1 // loop_exit
      _
    %1747 = vsyncpa [#allocation5], 1
    %s1748 = scalar_lea.sflag [#allocation5], 1
    %1749 = vsyncpa %s1748, 1
    %1750 = vsyncpa [#allocation6], 1
    %s1751 = scalar_lea.sflag [#allocation6], 1
    %1752 = vsyncpa %s1751, 1

</llo_original>
